<compile_context>
chip_gen: v7x
topology: tpu7x:2x2x1
jax: 0.10.0
libtpu: 0.0.40
codegen_flags: <defaults>
</compile_context>

<pallas_src>
import math
import numpy as np
import jax
import jax.numpy as jnp
from jax import lax
from jax.experimental import pallas as pl
from jax.experimental.pallas import tpu as pltpu


# ----------------------------------------------------------------------------
# helpers
# ----------------------------------------------------------------------------
def make_kernel(k):
    k = np.asarray(k, dtype=np.float32)
    if k.ndim == 1:
        k = k[None, :] * k[:, None]
    k = k / k.sum()
    return k


def _compiler_params(parallel=True):
    return pltpu.CompilerParams(
        dimension_semantics=("parallel",) if parallel else ("arbitrary",),
        vmem_limit_bytes=32 * 1024 * 1024,
    )


_BUFFERED1_OK = None


def _single_buffer_supported():
    """Probe once whether pipeline_mode=pl.Buffered(1) lowers on this build."""
    global _BUFFERED1_OK
    if _BUFFERED1_OK is None:
        try:
            def _k(x_ref, o_ref):
                o_ref[...] = x_ref[...] + 1.0

            out = pl.pallas_call(
                _k,
                out_shape=jax.ShapeDtypeStruct((8, 128), jnp.float32),
                grid=(1,),
                in_specs=[pl.BlockSpec((8, 128), lambda i: (0, 0),
                                       pipeline_mode=pl.Buffered(1))],
                out_specs=pl.BlockSpec((8, 128), lambda i: (0, 0)),
            )(jnp.zeros((8, 128), jnp.float32))
            jax.block_until_ready(out)
            _BUFFERED1_OK = True
        except Exception:
            _BUFFERED1_OK = False
    return _BUFFERED1_OK


def _const_spec(block_shape, index_map):
    """BlockSpec for a grid-invariant operand: single-buffered when supported."""
    if _single_buffer_supported():
        return pl.BlockSpec(block_shape, index_map, pipeline_mode=pl.Buffered(1))
    return pl.BlockSpec(block_shape, index_map)


# ----------------------------------------------------------------------------
# Blur (upfirdn2d, up=1, down=1) -- separable FIR Pallas kernel, NHWC, bf16 IO
# ----------------------------------------------------------------------------
def blur_pallas(x, taps1d, pad):
    """out = upfirdn2d(x, outer(t,t)/sum^2, pad=(pad0,pad1)); x is NHWC."""
    N, H, W, C = x.shape
    kt = int(np.asarray(taps1d).shape[0])
    pad0, pad1 = pad
    xp = jnp.pad(x, ((0, 0), (pad0, pad1), (pad0, pad1), (0, 0)))
    Hp, Wp = H + pad0 + pad1, W + pad0 + pad1
    Ho, Wo = Hp - kt + 1, Wp - kt + 1

    # separable taps; flip -> true convolution (upfirdn2d flips the FIR kernel)
    t = np.asarray(taps1d, np.float64)
    t = (t / t.sum())[::-1]
    taps = [float(v) for v in t]          # baked as immediates, no SMEM ref

    def kern(x_ref, o_ref, tmp_ref):
        # vertical pass: shifts hit the outer (H) axis only; accumulate in f32
        acc = x_ref[0, 0:Ho, :, :].astype(jnp.float32) * taps[0]
        for i in range(1, kt):
            acc = acc + x_ref[0, i:i + Ho, :, :].astype(jnp.float32) * taps[i]
        tmp_ref[...] = acc
        # horizontal pass: shifts hit the sublane (W) axis; C stays lane-dense
        out = tmp_ref[:, 0:Wo, :] * taps[0]
        for j in range(1, kt):
            out = out + tmp_ref[:, j:j + Wo, :] * taps[j]
        o_ref[0] = out.astype(o_ref.dtype)

    # TODO(synk): fuse the blur into the following stride-2 conv (polyphase
    # domain) to drop this intermediate's HBM round trip entirely.
    return pl.pallas_call(
        kern,
        out_shape=jax.ShapeDtypeStruct((N, Ho, Wo, C), x.dtype),
        grid=(N,),
        in_specs=[pl.BlockSpec((1, Hp, Wp, C), lambda n: (n, 0, 0, 0))],
        out_specs=pl.BlockSpec((1, Ho, Wo, C), lambda n: (n, 0, 0, 0)),
        scratch_shapes=[pltpu.VMEM((Ho, Wp, C), jnp.float32)],
        compiler_params=_compiler_params(parallel=True),
    )(xp)


# ----------------------------------------------------------------------------
# EqualConv2d (+ fused LeakyReLU + optional fused residual) -- NHWC, bf16 MXU
# ----------------------------------------------------------------------------
def equal_conv2d_pallas(x, w_bf16, w_scale, bias, stride, padding, activate,
                        residual=None, res_scale=1.0,
                        negative_slope=0.2, act_scale=math.sqrt(2.0)):
    """x: (N,H,W,Cin) bf16; w_bf16: (kh,kw,Cin,Cout) bf16; bias: (Cout,) f32 or None.
    Computes act(conv(x, w*scale) + bias); if residual is given the epilogue
    also applies (y + residual) * res_scale before the single store."""
    N, H, W, Cin = x.shape
    kh, kw, _, Cout = w_bf16.shape
    s = int(stride)
    if padding:
        x = jnp.pad(x, ((0, 0), (padding, padding), (padding, padding), (0, 0)))
    Hp, Wp = H + 2 * padding, W + 2 * padding
    Hout = (Hp - kh) // s + 1
    Wout = (Wp - kw) // s + 1

    # Polyphase re-layout (same #bytes as the padded input): every in-kernel
    # tap slice becomes unit-stride and the channel axis stays on the lanes.
    Hp2, Wp2 = -(-Hp // s) * s, -(-Wp // s) * s
    if s > 1:
        if (Hp2, Wp2) != (Hp, Wp):
            x = jnp.pad(x, ((0, 0), (0, Hp2 - Hp), (0, Wp2 - Wp), (0, 0)))
        Hh, Wh = Hp2 // s, Wp2 // s
        xph = x.reshape(N, Hh, s, Wh, s, Cin).transpose(0, 2, 4, 1, 3, 5)
        xph = xph.reshape(N, s * s * Hh, Wh, Cin)
    else:
        Hh, Wh = Hp, Wp
        xph = x

    b = bias if bias is not None else jnp.zeros((Cout,), jnp.float32)
    b = b.astype(jnp.float32).reshape(1, Cout)

    has_res = residual is not None
    HW = Hout * Wout
    scale = float(w_scale)
    rsc = float(res_scale)
    ns, asc = float(negative_slope), float(act_scale)
    flat = (Wout % 8 == 0)          # flattened (HW,Cin) matmul keeps M large
    taps = [(i, j) for i in range(kh) for j in range(kw)]

    def kern(x_ref, w_ref, b_ref, *refs):
        if has_res:
            r_ref, o_ref = refs
        else:
            (o_ref,) = refs

        def tap_slice(i, j, y=None):
            row0 = ((i % s) * s + (j % s)) * Hh + (i // s)
            b0 = j // s
            if y is None:
                return x_ref[0, row0:row0 + Hout, b0:b0 + Wout, :]
            return x_ref[0, row0 + y, b0:b0 + Wout, :]

        if flat:
            # register accumulation over the unrolled taps, seeded by tap 0
            acc = None
            for (i, j) in taps:
                d = jnp.dot(tap_slice(i, j).reshape(HW, Cin), w_ref[i, j],
                            preferred_element_type=jnp.float32)
                acc = d if acc is None else acc + d
            y = acc * scale + b_ref[...]
            if activate:
                y = asc * jnp.where(y >= 0.0, y, ns * y)
            y = y.reshape(Hout, Wout, Cout)
            if has_res:
                y = (y + r_ref[0].astype(jnp.float32)) * rsc
            o_ref[0] = y.astype(o_ref.dtype)
        else:
            # tiny (<=4-wide) outputs: per-row matmuls, no reshapes needed
            for yy in range(Hout):
                acc = None
                for (i, j) in taps:
                    d = jnp.dot(tap_slice(i, j, yy), w_ref[i, j],
                                preferred_element_type=jnp.float32)
                    acc = d if acc is None else acc + d
                yv = acc * scale + b_ref[...]
                if activate:
                    yv = asc * jnp.where(yv >= 0.0, yv, ns * yv)
                if has_res:
                    yv = (yv + r_ref[0, yy].astype(jnp.float32)) * rsc
                o_ref[0, yy] = yv.astype(o_ref.dtype)

    in_specs = [
        pl.BlockSpec((1, s * s * Hh, Wh, Cin), lambda n: (n, 0, 0, 0)),
        _const_spec((kh, kw, Cin, Cout), lambda n: (0, 0, 0, 0)),
        _const_spec((1, Cout), lambda n: (0, 0)),
    ]
    operands = [xph, w_bf16, b]
    if has_res:
        in_specs.append(pl.BlockSpec((1, Hout, Wout, Cout),
                                     lambda n: (n, 0, 0, 0)))
        operands.append(residual)

    # TODO(synk): for realistic resolutions add a halo'd H-tiling grid axis
    # (bounds v7x's 64 MiB VMEM, adds pipeline depth) and batch several images
    # per grid step for the 8x8/4x4 layers to raise the matmul M dimension.
    return pl.pallas_call(
        kern,
        out_shape=jax.ShapeDtypeStruct((N, Hout, Wout, Cout), x.dtype),
        grid=(N,),
        in_specs=in_specs,
        out_specs=pl.BlockSpec((1, Hout, Wout, Cout), lambda n: (n, 0, 0, 0)),
        compiler_params=_compiler_params(parallel=True),
    )(*operands)


# ----------------------------------------------------------------------------
# Final linear head: lin1 (K-tiled) + fused leaky-relu + lin2 folded into the
# last-K-step epilogue.  bf16 MXU operands, f32 accumulation/epilogue.
# ----------------------------------------------------------------------------
def equal_linear_head_pallas(x, w1t_bf16, b1, scale1, w2t_bf16, b2, scale2,
                             negative_slope=0.2, act_scale=math.sqrt(2.0)):
    B, K = x.shape
    O1 = w1t_bf16.shape[1]
    O2 = w2t_bf16.shape[1]

    tk = K
    for cand in (2048, 1024, 512, 256, 128):
        if K % cand == 0:
            tk = cand
            break
    nk = K // tk

    b1r = b1.astype(jnp.float32).reshape(1, O1)
    b2r = b2.astype(jnp.float32).reshape(1, O2)
    sc1, sc2 = float(scale1), float(scale2)
    ns, asc = float(negative_slope), float(act_scale)

    def kern(x_ref, w1_ref, b1_ref, w2_ref, b2_ref, o_ref, acc_ref):
        @pl.when(pl.program_id(0) == 0)
        def _():
            acc_ref[...] = jnp.zeros_like(acc_ref)

        acc_ref[...] += jnp.dot(x_ref[...], w1_ref[...],
                                preferred_element_type=jnp.float32)

        @pl.when(pl.program_id(0) == pl.num_programs(0) - 1)
        def _():
            y = acc_ref[...] * sc1 + b1_ref[...]
            y = asc * jnp.where(y >= 0.0, y, ns * y)
            y2 = jnp.dot(y.astype(w2_ref.dtype), w2_ref[...],
                         preferred_element_type=jnp.float32)
            o_ref[...] = (y2 * sc2 + b2_ref[...]).astype(o_ref.dtype)

    return pl.pallas_call(
        kern,
        out_shape=jax.ShapeDtypeStruct((B, O2), jnp.float32),
        grid=(nk,),
        in_specs=[
            pl.BlockSpec((B, tk), lambda k: (0, k)),
            pl.BlockSpec((tk, O1), lambda k: (k, 0)),
            _const_spec((1, O1), lambda k: (0, 0)),
            _const_spec((O1, O2), lambda k: (0, 0)),
            _const_spec((1, O2), lambda k: (0, 0)),
        ],
        out_specs=pl.BlockSpec((B, O2), lambda k: (0, 0)),
        scratch_shapes=[pltpu.VMEM((B, O1), jnp.float32)],
        compiler_params=_compiler_params(parallel=False),
    )(x, w1t_bf16, b1r, w2t_bf16, b2r)


# ----------------------------------------------------------------------------
# Discriminator (JAX / Pallas port of the PyTorch module)
# ----------------------------------------------------------------------------
class Discriminator:
    def __init__(self, sizex, sizey, channel_multiplier=2,
                 blur_kernel=(1, 3, 3, 1), key=jax.random.PRNGKey(0)):
        channels = {4: 512, 8: 512, 16: 512, 32: 512,
                    64: 256 * channel_multiplier, 128: 128 * channel_multiplier,
                    256: 64 * channel_multiplier, 512: 32 * channel_multiplier,
                    1024: 16 * channel_multiplier}
        size = max(sizex, sizey)
        log_size = int(math.log2(size))     # exact for powers of two

        self.blur_taps = np.asarray(blur_kernel, np.float32)
        self.stddev_group = 4
        self.stddev_feat = 1

        keys = iter(jax.random.split(key, 64))

        def conv_params(cin, cout, k, with_bias):
            w = jax.random.normal(next(keys), (k, k, cin, cout), jnp.float32)
            return dict(
                w=w,                                  # f32 master (reference)
                w_bf16=w.astype(jnp.bfloat16),        # pre-cast for the MXU
                scale=1.0 / math.sqrt(cin * k * k),
                bias=jnp.zeros((cout,), jnp.float32) if with_bias else None,
                k=k)

        # ConvLayer(3, ch, 1): EqualConv2d (no bias) + FusedLeakyReLU (bias)
        in_ch = channels[size]
        self.conv0 = conv_params(3, in_ch, 1, with_bias=True)

        kt = len(blur_kernel)
        self.blocks = []
        for i in range(log_size, 2, -1):
            out_ch = channels[2 ** (i - 1)]
            p_main = kt - 2 + (3 - 1)
            p_skip = kt - 2 + (1 - 1)
            self.blocks.append(dict(
                conv1=conv_params(in_ch, in_ch, 3, True),        # 3x3 s1 p1 + act
                blur2_pad=((p_main + 1) // 2, p_main // 2),
                conv2=conv_params(in_ch, out_ch, 3, True),       # 3x3 s2 p0 + act
                blur_skip_pad=((p_skip + 1) // 2, p_skip // 2),
                skip=conv_params(in_ch, out_ch, 1, False),       # 1x1 s2, no bias/act
            ))
            in_ch = out_ch

        n_down = len(self.blocks)
        self.endx = sizex // (2 ** n_down)
        self.endy = sizey // (2 ** n_down)

        self.final_conv = conv_params(in_ch + 1, channels[4], 3, True)

        cf = channels[4]
        in_dim = cf * self.endx * self.endy
        self.lin1_w = jax.random.normal(next(keys), (cf, in_dim), jnp.float32)
        self.lin1_b = jnp.zeros((cf,), jnp.float32)
        self.lin1_scale = 1.0 / math.sqrt(in_dim)
        self.lin2_w = jax.random.normal(next(keys), (1, cf), jnp.float32)
        self.lin2_b = jnp.zeros((1,), jnp.float32)
        self.lin2_scale = 1.0 / math.sqrt(cf)

        # Pre-permute lin1's input dim from torch NCHW-flatten order to the
        # NHWC-flatten order the Pallas path produces (no runtime transpose),
        # then pre-transpose/cast for the K-tiled matmul.
        perm = np.arange(cf * self.endx * self.endy).reshape(
            cf, self.endx, self.endy).transpose(1, 2, 0).reshape(-1)
        self.lin1_wt_bf16 = jnp.transpose(self.lin1_w[:, perm]).astype(jnp.bfloat16)
        self.lin2_wt_bf16 = jnp.transpose(self.lin2_w).astype(jnp.bfloat16)

    def _conv(self, x, p, stride, padding, activate,
              residual=None, res_scale=1.0):
        return equal_conv2d_pallas(x, p['w_bf16'], p['scale'], p['bias'],
                                   stride=stride, padding=padding,
                                   activate=activate, residual=residual,
                                   res_scale=res_scale)

    def __call__(self, x_nchw):
        x = jnp.transpose(x_nchw, (0, 2, 3, 1)).astype(jnp.bfloat16)   # NHWC bf16
        x = self._conv(x, self.conv0, 1, 0, True)
        inv_sqrt2 = 1.0 / math.sqrt(2.0)
        for blk in self.blocks:
            # skip path first so it can be fused into conv2's epilogue
            skip = blur_pallas(x, self.blur_taps, blk['blur_skip_pad'])
            skip = self._conv(skip, blk['skip'], 2, 0, False)
            out = self._conv(x, blk['conv1'], 1, 1, True)
            out = blur_pallas(out, self.blur_taps, blk['blur2_pad'])
            x = self._conv(out, blk['conv2'], 2, 0, True,
                           residual=skip, res_scale=inv_sqrt2)

        # minibatch-stddev directly in NHWC (tiny XLA glue; stddev_feat == 1)
        B, H, W, C = x.shape
        group = min(B, self.stddev_group)
        # TODO(synk): guard B % group == 0 (same limitation as the PyTorch original)
        y = x.astype(jnp.float32).reshape(group, B // group, H, W, C)
        std = jnp.sqrt(jnp.var(y, axis=0) + 1e-8)
        std = jnp.mean(std, axis=(1, 2, 3))                       # (B//group,)
        std = jnp.tile(std, (group,))                             # (B,)
        std = jnp.broadcast_to(std[:, None, None, None], (B, H, W, 1))
        x = jnp.concatenate([x, std.astype(x.dtype)], axis=-1)    # (B,H,W,C+1)

        x = self._conv(x, self.final_conv, 1, 1, True)
        x = x.reshape(B, -1)              # NHWC flatten (lin1 weights permuted)
        return equal_linear_head_pallas(
            x, self.lin1_wt_bf16, self.lin1_b, self.lin1_scale,
            self.lin2_wt_bf16, self.lin2_b, self.lin2_scale)


# ----------------------------------------------------------------------------
# independent pure-JAX (lax.conv, f32 HIGHEST) reference for correctness check
# ----------------------------------------------------------------------------
def _flrelu_ref(x, bias, negative_slope=0.2, scale=math.sqrt(2.0)):
    b = bias.reshape((1, -1) + (1,) * (x.ndim - 2))
    y = x + b
    return scale * jnp.where(y >= 0, y, negative_slope * y)


def _conv2d_ref(x, w_khwio, scale, bias, stride, padding):
    w = jnp.transpose(w_khwio, (3, 2, 0, 1)) * scale              # OIHW
    out = lax.conv_general_dilated(
        x, w, (stride, stride), [(padding, padding), (padding, padding)],
        dimension_numbers=('NCHW', 'OIHW', 'NCHW'),
        precision=lax.Precision.HIGHEST)
    if bias is not None:
        out = out + bias.reshape(1, -1, 1, 1)
    return out


def _blur_ref(x, taps1d, pad):
    C = x.shape[1]
    k2d = make_kernel(taps1d)
    k2d = jnp.asarray(np.ascontiguousarray(k2d[::-1, ::-1]))      # flip -> conv
    w = jnp.tile(k2d[None, None], (C, 1, 1, 1))
    return lax.conv_general_dilated(
        x, w, (1, 1), [(pad[0], pad[1]), (pad[0], pad[1])],
        dimension_numbers=('NCHW', 'OIHW', 'NCHW'),
        feature_group_count=C, precision=lax.Precision.HIGHEST)


def discriminator_ref(model, x_nchw):
    def conv_layer(x, p, stride, padding, activate):
        if activate:
            y = _conv2d_ref(x, p['w'], p['scale'], None, stride, padding)
            return _flrelu_ref(y, p['bias'])
        return _conv2d_ref(x, p['w'], p['scale'], p['bias'], stride, padding)

    x = conv_layer(x_nchw.astype(jnp.float32), model.conv0, 1, 0, True)
    for blk in model.blocks:
        out = conv_layer(x, blk['conv1'], 1, 1, True)
        out = _blur_ref(out, model.blur_taps, blk['blur2_pad'])
        out = conv_layer(out, blk['conv2'], 2, 0, True)
        skip = _blur_ref(x, model.blur_taps, blk['blur_skip_pad'])
        skip = conv_layer(skip, blk['skip'], 2, 0, False)
        x = (out + skip) / math.sqrt(2.0)

    B, C, H, W = x.shape
    group = min(B, model.stddev_group)
    y = x.reshape(group, -1, model.stddev_feat, C // model.stddev_feat, H, W)
    std = jnp.sqrt(jnp.var(y, axis=0) + 1e-8)
    std = jnp.mean(std, axis=(2, 3, 4), keepdims=True)[:, :, 0]
    std = jnp.tile(std, (group, 1, H, W))
    x = jnp.concatenate([x, std], axis=1)

    x = conv_layer(x, model.final_conv, 1, 1, True)
    x = x.reshape(B, -1)
    x = jnp.dot(x, (model.lin1_w * model.lin1_scale).T,
                precision=lax.Precision.HIGHEST)
    x = _flrelu_ref(x, model.lin1_b)
    x = jnp.dot(x, (model.lin2_w * model.lin2_scale).T,
                precision=lax.Precision.HIGHEST) + model.lin2_b
    return x


if __name__ == "__main__":
    key = jax.random.PRNGKey(0)
    k_model, k_input = jax.random.split(key)

    sizex = sizey = 16
    disc = Discriminator(sizex, sizey, channel_multiplier=2, key=k_model)

    x = jax.random.normal(k_input, (2, 3, sizex, sizey), dtype=jnp.float32)  # NCHW

    out = jax.block_until_ready(disc(x))
    assert out.shape == (2, 1), out.shape

    # f32 HIGHEST-precision reference; loose tolerance covers the bf16 datapath
    ref = jax.block_until_ready(discriminator_ref(disc, x))
    np.testing.assert_allclose(np.asarray(out), np.asarray(ref),
                               rtol=1e-1, atol=1e-1)

    print("KERNEL_OK")
</pallas_src>

<mosaic_0001>
module attributes {stable_mosaic.version = 11 : i64} {
  func.func @_k(%arg0: i32, %arg1: memref<8x128xf32, #tpu.memory_space<vmem>>, %arg2: memref<8x128xf32, #tpu.memory_space<vmem>>) attributes {dimension_semantics = [#tpu.dimension_semantics<arbitrary>], iteration_bounds = array<i64: 1>, scalar_prefetch = 0 : i64, scratch_operands = 0 : i64, tpu.core_type = #tpu.core_type<tc>, window_params = [{pipeline_mode = #tpu.pipeline_mode<synchronous>, transform_indices = @transform_0, window_bounds = array<i64: 8, 128>}, {pipeline_mode = #tpu.pipeline_mode<synchronous>, transform_indices = @transform_1, window_bounds = array<i64: 8, 128>}]} {
    %c0 = arith.constant 0 : index
    %c0_0 = arith.constant 0 : index
    %0 = vector.load %arg1[%c0, %c0_0] : memref<8x128xf32, #tpu.memory_space<vmem>>, vector<8x128xf32>
    %cst = arith.constant 1.000000e+00 : f32
    %1 = vector.broadcast %cst : f32 to vector<8x128xf32>
    %2 = arith.addf %0, %1 : vector<8x128xf32>
    %c0_1 = arith.constant 0 : index
    %c0_2 = arith.constant 0 : index
    %3 = vector.load %arg2[%c0_1, %c0_2] : memref<8x128xf32, #tpu.memory_space<vmem>>, vector<8x128xf32>
    tpu.vector_store %arg2[%c0_1, %c0_2], %2 {strides = array<i32>} : memref<8x128xf32, #tpu.memory_space<vmem>>, vector<8x128xf32>,
    return
  }
  func.func @transform_0(%arg0: i32) -> (i32, i32) {
    %c0_i32 = arith.constant 0 : i32
    %c0_i32_0 = arith.constant 0 : i32
    %c0_i32_1 = arith.constant 0 : i32
    return %c0_i32, %c0_i32_0 : i32, i32
  }
  func.func @transform_1(%arg0: i32) -> (i32, i32) {
    %c0_i32 = arith.constant 0 : i32
    %c0_i32_0 = arith.constant 0 : i32
    %c0_i32_1 = arith.constant 0 : i32
    return %c0_i32, %c0_i32_0 : i32, i32
  }
}

module attributes {stable_mosaic.version = 11 : i64} {
  func.func @kern(%arg0: i32, %arg1: memref<1x16x16x3xbf16, #tpu.memory_space<vmem>>, %arg2: memref<1x1x3x512xbf16, #tpu.memory_space<vmem>>, %arg3: memref<1x512xf32, #tpu.memory_space<vmem>>, %arg4: memref<1x16x16x512xbf16, #tpu.memory_space<vmem>>) attributes {dimension_semantics = [#tpu.dimension_semantics<parallel>], iteration_bounds = array<i64: 2>, scalar_prefetch = 0 : i64, scratch_operands = 0 : i64, tpu.core_type = #tpu.core_type<tc>, window_params = [{transform_indices = @transform_0, window_bounds = array<i64: 1, 16, 16, 3>}, {pipeline_mode = #tpu.pipeline_mode<synchronous>, transform_indices = @transform_1, window_bounds = array<i64: 1, 1, 3, 512>}, {pipeline_mode = #tpu.pipeline_mode<synchronous>, transform_indices = @transform_2, window_bounds = array<i64: 1, 512>}, {transform_indices = @transform_3, window_bounds = array<i64: 1, 16, 16, 512>}]} {
    %c0 = arith.constant 0 : index
    %c0_0 = arith.constant 0 : index
    %c0_1 = arith.constant 0 : index
    %c0_2 = arith.constant 0 : index
    %0 = vector.load %arg1[%c0, %c0_0, %c0_1, %c0_2] : memref<1x16x16x3xbf16, #tpu.memory_space<vmem>>, vector<1x16x16x3xbf16>
    %1 = vector.shape_cast %0 : vector<1x16x16x3xbf16> to vector<16x16x3xbf16>
    %2 = vector.shape_cast %1 : vector<16x16x3xbf16> to vector<256x3xbf16>
    %c0_3 = arith.constant 0 : index
    %c0_4 = arith.constant 0 : index
    %c0_5 = arith.constant 0 : index
    %c0_6 = arith.constant 0 : index
    %3 = vector.load %arg2[%c0_3, %c0_4, %c0_5, %c0_6] : memref<1x1x3x512xbf16, #tpu.memory_space<vmem>>, vector<1x1x3x512xbf16>
    %4 = vector.shape_cast %3 : vector<1x1x3x512xbf16> to vector<3x512xbf16>
    %cst = arith.constant dense<0.000000e+00> : vector<256x512xf32>
    %5 = tpu.matmul %2, %4, %cst {dimension_numbers = #tpu.dot_dimension_numbers<[1], [0], [0], [1], [0, 0, 1, 1], [], []>} : vector<256x3xbf16>, vector<3x512xbf16>, vector<256x512xf32> -> vector<256x512xf32>
    %cst_7 = arith.constant 0.577350259 : f32
    %6 = vector.broadcast %cst_7 : f32 to vector<256x512xf32>
    %7 = arith.mulf %5, %6 : vector<256x512xf32>
    %c0_8 = arith.constant 0 : index
    %c0_9 = arith.constant 0 : index
    %8 = vector.load %arg3[%c0_8, %c0_9] : memref<1x512xf32, #tpu.memory_space<vmem>>, vector<1x512xf32>
    %9 = vector.broadcast %8 : vector<1x512xf32> to vector<256x512xf32>
    %10 = arith.addf %7, %9 : vector<256x512xf32>
    %cst_10 = arith.constant 0.000000e+00 : f32
    %11 = vector.broadcast %cst_10 : f32 to vector<256x512xf32>
    %12 = arith.cmpf oge, %10, %11 : vector<256x512xf32>
    %cst_11 = arith.constant 2.000000e-01 : f32
    %13 = vector.broadcast %cst_11 : f32 to vector<256x512xf32>
    %14 = arith.mulf %13, %10 : vector<256x512xf32>
    %15 = arith.select %12, %10, %14 : vector<256x512xi1>, vector<256x512xf32>
    %cst_12 = arith.constant 1.41421354 : f32
    %16 = vector.broadcast %cst_12 : f32 to vector<256x512xf32>
    %17 = arith.mulf %16, %15 : vector<256x512xf32>
    %18 = vector.shape_cast %17 : vector<256x512xf32> to vector<16x16x512xf32>
    %19 = arith.truncf %18 : vector<16x16x512xf32> to vector<16x16x512xbf16>
    %c0_13 = arith.constant 0 : index
    %c0_14 = arith.constant 0 : index
    %c0_15 = arith.constant 0 : index
    %c0_16 = arith.constant 0 : index
    %20 = vector.load %arg4[%c0_13, %c0_14, %c0_15, %c0_16] : memref<1x16x16x512xbf16, #tpu.memory_space<vmem>>, vector<1x16x16x512xbf16>
    %21 = vector.shape_cast %20 : vector<1x16x16x512xbf16> to vector<16x16x512xbf16>
    %22 = vector.shape_cast %19 : vector<16x16x512xbf16> to vector<1x16x16x512xbf16>
    tpu.vector_store %arg4[%c0_13, %c0_14, %c0_15, %c0_16], %22 {strides = array<i32>} : memref<1x16x16x512xbf16, #tpu.memory_space<vmem>>, vector<1x16x16x512xbf16>,
    return
  }
  func.func @transform_0(%arg0: i32) -> (i32, i32, i32, i32) {
    %c0_i32 = arith.constant 0 : i32
    %c0_i32_0 = arith.constant 0 : i32
    %c0_i32_1 = arith.constant 0 : i32
    %c0_i32_2 = arith.constant 0 : i32
    return %arg0, %c0_i32, %c0_i32_0, %c0_i32_1 : i32, i32, i32, i32
  }
  func.func @transform_1(%arg0: i32) -> (i32, i32, i32, i32) {
    %c0_i32 = arith.constant 0 : i32
    %c0_i32_0 = arith.constant 0 : i32
    %c0_i32_1 = arith.constant 0 : i32
    %c0_i32_2 = arith.constant 0 : i32
    %c0_i32_3 = arith.constant 0 : i32
    return %c0_i32, %c0_i32_0, %c0_i32_1, %c0_i32_2 : i32, i32, i32, i32
  }
  func.func @transform_2(%arg0: i32) -> (i32, i32) {
    %c0_i32 = arith.constant 0 : i32
    %c0_i32_0 = arith.constant 0 : i32
    %c0_i32_1 = arith.constant 0 : i32
    return %c0_i32, %c0_i32_0 : i32, i32
  }
  func.func @transform_3(%arg0: i32) -> (i32, i32, i32, i32) {
    %c0_i32 = arith.constant 0 : i32
    %c0_i32_0 = arith.constant 0 : i32
    %c0_i32_1 = arith.constant 0 : i32
    %c0_i32_2 = arith.constant 0 : i32
    return %arg0, %c0_i32, %c0_i32_0, %c0_i32_1 : i32, i32, i32, i32
  }
}

</mosaic_0001>

<llo_original>
// kernel: tpu_custom_call.1
$region0: #{tpu_custom_call.1}
  #allocation0 [shape = 'u32[]', space=smem, size = 0x4, offset = 0x4, fixed_abs, tag = 'smem constant byte address 0x4 - core index']
  #allocation1 [shape = 'u32[144,128]{1,0:T(1,128)}', space=vmem, size = 0x12000, scoped, tag = 'internal scratch']
  %s0 = inlined_call_operand.hbm [shape: f32[8,128], index: 0, kind: input, shape index: {}]
  %s1 = inlined_call_operand.hbm [shape: f32[8,128], index: 1, kind: output, shape index: {}]
  %s2 = sld [smem:[#allocation0]]
  $region18: #{tpu_custom_call.1} parent=0
    _
  %s4 = ssub.s32 1, %s2
  %s5 = scalar_select 0, %s4, %s2
  $region1: #{tpu_custom_call.1} parent=0
    #allocation2 [shape = 'u8[4096]{0}', space=vmem, size = 0x1000, scoped, tag = 'input window, operand 0, single buffered']
    #allocation3 [shape = 's32[1]{0}', space=sflag, size = 0x4, scoped, tag = 'scoped memory for tpu_custom_call.1']
    #allocation4 [shape = 's32[1]{0}', space=sflag, size = 0x4, scoped, tag = 'scoped memory for tpu_custom_call.1']
    #allocation5 [shape = 'u8[4096]{0}', space=vmem, size = 0x1000, scoped, tag = 'output window, operand 0, single buffered']
    %6 = vsyncpa [#allocation3], 0
    %7 = vsyncpa [#allocation4], 0
    // Predicated region
    $region2: #{tpu_custom_call.1} parent=1 // pred_check
      _
    $region3: #{tpu_custom_call.1} parent=1 // pred_check_branch
      %9 = sbr.rel (0) target = $region5
    $region4: #{tpu_custom_call.1} parent=1 // pred_region
      %s11 = ssub.s32 128, 128
      %12 = vsyncadd [#allocation3], %s11
      %s14 = sshll.u32 [#allocation2], 4
      %s15 = int_to_ptr.vmem [resolvable:$true] %s14
      %17 = dma.hbm_to_vmem [thread:$0]  %s0, 128, %s15, [#allocation3]
    $region5: #{tpu_custom_call.1} parent=1 // pred_fallthru
      _
    // Predicated region
    $region6: #{tpu_custom_call.1} parent=1 // pred_check
      _
    $region7: #{tpu_custom_call.1} parent=1 // pred_check_branch
      %19 = sbr.rel (0) target = $region9
    $region8: #{tpu_custom_call.1} parent=1 // pred_region
      %20 = dma.done [#allocation3], 128
    $region9: #{tpu_custom_call.1} parent=1 // pred_fallthru
      _
    %v21 = vld [vmem:[#allocation2] sm:$0xff]
    %v22 = vadd.f32 %v21, 1.0
    %23 = vst [vmem:[#allocation5] sm:$0xff] %v22
    // Predicated region
    $region10: #{tpu_custom_call.1} parent=1 // pred_check
      _
    $region11: #{tpu_custom_call.1} parent=1 // pred_check_branch
      %25 = sbr.rel (0) target = $region13
    $region12: #{tpu_custom_call.1} parent=1 // pred_region
      %s27 = ssub.s32 128, 128
      %28 = vsyncadd [#allocation4], %s27
      %s30 = sshll.u32 [#allocation5], 4
      %s31 = int_to_ptr.vmem [resolvable:$true] %s30
      %33 = dma.vmem_to_hbm [thread:$0]  %s31, 128, %s1, [#allocation4]
    $region13: #{tpu_custom_call.1} parent=1 // pred_fallthru
      _
    // Predicated region
    $region14: #{tpu_custom_call.1} parent=1 // pred_check
      _
    $region15: #{tpu_custom_call.1} parent=1 // pred_check_branch
      %35 = sbr.rel (0) target = $region17
    $region16: #{tpu_custom_call.1} parent=1 // pred_region
      %36 = dma.done [#allocation4], 128
    $region17: #{tpu_custom_call.1} parent=1 // pred_fallthru
      _
    %37 = vsyncpa [#allocation3], 1
    %38 = vsyncpa [#allocation4], 1

// kernel: tpu_custom_call.1
$region0: #{tpu_custom_call.1}
  #allocation0 [shape = 'u32[]', space=smem, size = 0x4, offset = 0x4, fixed_abs, tag = 'smem constant byte address 0x4 - core index']
  #allocation1 [shape = 'u32[144,128]{1,0:T(1,128)}', space=vmem, size = 0x12000, scoped, tag = 'internal scratch']
  %s0 = inlined_call_operand.vmem [shape: bf16[2,16,16,3], index: 0, kind: input, shape index: {}]
  %s1 = inlined_call_operand.vmem [shape: bf16[1,1,3,512], index: 1, kind: input, shape index: {}]
  %s2 = inlined_call_operand.vmem [shape: f32[1,512], index: 2, kind: input, shape index: {}]
  %s3 = inlined_call_operand.hbm [shape: bf16[2,16,16,512], index: 3, kind: output, shape index: {}]
  %s4 = sld [smem:[#allocation0]]
  $region45: #{tpu_custom_call.1} parent=0
    _
  %s6 = ssub.s32 1, %s4
  %s7 = scalar_select 0, %s6, %s4
  $region1: #{tpu_custom_call.1} parent=0
    #allocation2 [shape = 'u8[524288]{0}', space=vmem, size = 0x80000, scoped, tag = 'output window, operand 0']
    #allocation3 [shape = 's32[2]{0}', space=sflag, size = 0x8, scoped, tag = 'scoped memory for tpu_custom_call.1']
    %8 = vsyncpa [#allocation3], 0
    %s9 = scalar_lea.sflag [#allocation3], 1
    %10 = vsyncpa %s9, 0
    loop: start=0, step=1, limit=4
    $region2: #{tpu_custom_call.1} parent=1 // loop_pre_header
      _
    $region3: #{tpu_custom_call.1} parent=1 // loop_header
      %s12 = sphi 0, %s16
      %p13 = scmp.ge.s32.totalorder %s12, 4
      %s22 = sphi 0, %s24
      %s25 = sphi 0, %s22
      %s26 = sphi 0, %s25
      %s42 = sphi 0, %s26
      %s46 = sphi 0, %s46
      %s48 = sphi 0, %s46
      %s49 = sphi 0, %s48
      %s63 = sphi 0, %s49
      %s67 = sphi 0, %s67
      %s69 = sphi 0, %s67
      %s70 = sphi 0, %s69
      %s84 = sphi 0, %s70
      %s90 = sphi 0, %s92
      %s93 = sphi 0, %s90
      %s94 = sphi 0, %s93
      %s110 = sphi 0, %s94
    $region4: #{tpu_custom_call.1} parent=1 // loop_header_branch
      %15 = sbr.rel (%p13) target = $region8
    $region5: #{tpu_custom_call.1} parent=1 // loop_body
      %s17 = ssub.s32 %s12, 1
      %s18 = ssub.s32 %s12, 2
      %s19 = sadd.s32 %s12, 1
      %s20 = ssub.s32 %s12, %s19
      %p21 = scmp.eq.s32.totalorder %s20, 0
      %s23 = sadd.s32 %s22, 1
      %s24 = scalar_select %p21, %s22, %s23
      %p27 = pneg %p21
      %p28 = scmp.eq.s32.totalorder %s12, 1
      %p29 = por %p27, %p28
      %p30 = scmp.ne.s32.totalorder %s22, %s25
      %p31 = scmp.eq.s32.totalorder %s12, 0
      %p32 = por %p30, %p31
      %p33 = scmp.ne.s32.totalorder %s22, %s25
      %p34 = scmp.eq.s32.totalorder %s17, 1
      %p35 = por %p33, %p34
      %p36 = scmp.ne.s32.totalorder %s25, %s26
      %p37 = scmp.eq.s32.totalorder %s17, 0
      %p38 = por %p36, %p37
      %p39 = scmp.ne.s32.totalorder %s25, %s26
      %p40 = scmp.eq.s32.totalorder %s18, 1
      %p41 = por %p39, %p40
      %p43 = scmp.ne.s32.totalorder %s26, %s42
      %p44 = scmp.eq.s32.totalorder %s18, 0
      %p45 = por %p43, %p44
      %s47 = sadd.s32 %s46, 1
      %p50 = scmp.eq.s32.totalorder %s12, 1
      %p51 = scmp.ne.s32.totalorder %s46, %s48
      %p52 = scmp.eq.s32.totalorder %s12, 0
      %p53 = por %p51, %p52
      %p54 = scmp.ne.s32.totalorder %s46, %s48
      %p55 = scmp.eq.s32.totalorder %s17, 1
      %p56 = por %p54, %p55
      %p57 = scmp.ne.s32.totalorder %s48, %s49
      %p58 = scmp.eq.s32.totalorder %s17, 0
      %p59 = por %p57, %p58
      %p60 = scmp.ne.s32.totalorder %s48, %s49
      %p61 = scmp.eq.s32.totalorder %s18, 1
      %p62 = por %p60, %p61
      %p64 = scmp.ne.s32.totalorder %s49, %s63
      %p65 = scmp.eq.s32.totalorder %s18, 0
      %p66 = por %p64, %p65
      %s68 = sadd.s32 %s67, 1
      %p71 = scmp.eq.s32.totalorder %s12, 1
      %p72 = scmp.ne.s32.totalorder %s67, %s69
      %p73 = scmp.eq.s32.totalorder %s12, 0
      %p74 = por %p72, %p73
      %p75 = scmp.ne.s32.totalorder %s67, %s69
      %p76 = scmp.eq.s32.totalorder %s17, 1
      %p77 = por %p75, %p76
      %p78 = scmp.ne.s32.totalorder %s69, %s70
      %p79 = scmp.eq.s32.totalorder %s17, 0
      %p80 = por %p78, %p79
      %p81 = scmp.ne.s32.totalorder %s69, %s70
      %p82 = scmp.eq.s32.totalorder %s18, 1
      %p83 = por %p81, %p82
      %p85 = scmp.ne.s32.totalorder %s70, %s84
      %p86 = scmp.eq.s32.totalorder %s18, 0
      %p87 = por %p85, %p86
      %s88 = ssub.s32 %s12, %s19
      %p89 = scmp.eq.s32.totalorder %s88, 0
      %s91 = sadd.s32 %s90, 1
      %s92 = scalar_select %p89, %s90, %s91
      %p95 = pneg %p89
      %p96 = scmp.eq.s32.totalorder %s12, 1
      %p97 = por %p95, %p96
      %p98 = scmp.ne.s32.totalorder %s90, %s93
      %p99 = scmp.eq.s32.totalorder %s12, 0
      %p100 = por %p98, %p99
      %p101 = scmp.ne.s32.totalorder %s90, %s93
      %p102 = scmp.eq.s32.totalorder %s17, 1
      %p103 = por %p101, %p102
      %p104 = scmp.ne.s32.totalorder %s93, %s94
      %p105 = scmp.eq.s32.totalorder %s17, 0
      %p106 = por %p104, %p105
      %p107 = scmp.ne.s32.totalorder %s93, %s94
      %p108 = scmp.eq.s32.totalorder %s18, 1
      %p109 = por %p107, %p108
      %p111 = scmp.ne.s32.totalorder %s94, %s110
      %p112 = scmp.eq.s32.totalorder %s18, 0
      %p113 = por %p111, %p112
      %p114 = scmp.le.s32.totalorder 1, %s12
      %p115 = scmp.lt.s32.totalorder %s12, 3
      %p116 = pnand %p114, %p115
      %p117 = pneg %p116
      // Predicated region
      $region9: #{tpu_custom_call.1} parent=5 // pred_check
        _
      $region10: #{tpu_custom_call.1} parent=5 // pred_check_branch
        %119 = sbr.rel (%p116) target = $region12
      $region11: #{tpu_custom_call.1} parent=5 // pred_region
        %s120 = ssub.s32 %s12, 1
        // Predicated region
        $region13: #{tpu_custom_call.1} parent=11 // pred_check
          %p121 = pneg %p59
        $region14: #{tpu_custom_call.1} parent=11 // pred_check_branch
          %123 = sbr.rel (%p121) target = $region16
        $region15: #{tpu_custom_call.1} parent=11 // pred_region
          _
        $region16: #{tpu_custom_call.1} parent=11 // pred_fallthru
          _
        // Predicated region
        $region17: #{tpu_custom_call.1} parent=11 // pred_check
          %p124 = pneg %p80
        $region18: #{tpu_custom_call.1} parent=11 // pred_check_branch
          %126 = sbr.rel (%p124) target = $region20
        $region19: #{tpu_custom_call.1} parent=11 // pred_region
          _
        $region20: #{tpu_custom_call.1} parent=11 // pred_fallthru
          _
      $region12: #{tpu_custom_call.1} parent=5 // pred_fallthru
        _
      %p127 = scmp.lt.s32.totalorder %s12, 2
      // Predicated region
      $region21: #{tpu_custom_call.1} parent=5 // pred_check
        %p128 = pneg %p127
      $region22: #{tpu_custom_call.1} parent=5 // pred_check_branch
        %130 = sbr.rel (%p128) target = $region24
      $region23: #{tpu_custom_call.1} parent=5 // pred_region
        // Predicated region
        $region25: #{tpu_custom_call.1} parent=23 // pred_check
          %p131 = pneg %p32
        $region26: #{tpu_custom_call.1} parent=23 // pred_check_branch
          %133 = sbr.rel (%p131) target = $region28
        $region27: #{tpu_custom_call.1} parent=23 // pred_region
          %p134 = scmp.lt.s32.totalorder %s12, 1
          %s135 = scalar_select %p134, %s12, 1
          %s136 = smul.addr %s135, 32
          %s137 = smul.addr %s136, 4
          %s138 = scalar_lea.vmem %s0, %s137
        $region28: #{tpu_custom_call.1} parent=23 // pred_fallthru
          _
      $region24: #{tpu_custom_call.1} parent=5 // pred_fallthru
        _
      %p139 = scmp.le.s32.totalorder 1, %s12
      %p140 = scmp.lt.s32.totalorder %s12, 3
      %p141 = pnand %p139, %p140
      %p142 = pneg %p141
      // Predicated region
      $region29: #{tpu_custom_call.1} parent=5 // pred_check
        _
      $region30: #{tpu_custom_call.1} parent=5 // pred_check_branch
        %144 = sbr.rel (%p141) target = $region32
      $region31: #{tpu_custom_call.1} parent=5 // pred_region
        %s145 = ssub.s32 %s12, 1
        %p146 = scmp.lt.s32.totalorder %s17, 1
        %s147 = scalar_select %p146, %s17, 1
        %s148 = smul.addr %s147, 32
        %s149 = smul.addr %s148, 4
        %s150 = scalar_lea.vmem %s0, %s149
        %p151 = pneg %p38
        %p152 = pneg %p35
        %p153 = pneg %p59
        %p154 = pneg %p56
        %p155 = pneg %p80
        %p156 = pneg %p77
        %p157 = pneg %p106
        %p158 = pneg %p103
        %s159 = sand.u32 %s93, 1
        %s160 = scalar_lea.sflag [#allocation3], %s159
        %s161 = sand.u32 %s93, 1
        %s162 = smul.addr %s161, 512
        %s163 = scalar_lea.vmem [#allocation2], %s162
        %p164 = scmp.lt.s32.totalorder %s17, 1
        %s165 = scalar_select %p164, %s17, 1
        %s166 = smul.addr %s165, 32
        %s167 = smul.addr %s166, 4
        %s168 = scalar_lea.vmem %s0, %s167
        %v170 = vld [vmem:[%s168] sm:$0xf]
        %v171 = vld [vmem:[%s168 + $0x4] sm:$0xf]
        %v172 = vld [vmem:[%s168 + $0x8] sm:$0xf]
        %v173 = vld [vmem:[%s168 + $0xc] sm:$0xf]
        %v174 = vld [vmem:[%s168 + $0x10] sm:$0xf]
        %v175 = vld [vmem:[%s168 + $0x14] sm:$0xf]
        %v176 = vld [vmem:[%s168 + $0x18] sm:$0xf]
        %v177 = vld [vmem:[%s168 + $0x1c] sm:$0xf]
        %v178 = vld [vmem:[%s168 + $0x20] sm:$0xf]
        %v179 = vld [vmem:[%s168 + $0x24] sm:$0xf]
        %v180 = vld [vmem:[%s168 + $0x28] sm:$0xf]
        %v181 = vld [vmem:[%s168 + $0x2c] sm:$0xf]
        %v182 = vld [vmem:[%s168 + $0x30] sm:$0xf]
        %v183 = vld [vmem:[%s168 + $0x34] sm:$0xf]
        %v184 = vld [vmem:[%s168 + $0x38] sm:$0xf]
        %v185 = vld [vmem:[%s168 + $0x3c] sm:$0xf]
        %v186 = vld [vmem:[%s168 + $0x40] sm:$0xf]
        %v187 = vld [vmem:[%s168 + $0x44] sm:$0xf]
        %v188 = vld [vmem:[%s168 + $0x48] sm:$0xf]
        %v189 = vld [vmem:[%s168 + $0x4c] sm:$0xf]
        %v190 = vld [vmem:[%s168 + $0x50] sm:$0xf]
        %v191 = vld [vmem:[%s168 + $0x54] sm:$0xf]
        %v192 = vld [vmem:[%s168 + $0x58] sm:$0xf]
        %v193 = vld [vmem:[%s168 + $0x5c] sm:$0xf]
        %v194 = vld [vmem:[%s168 + $0x60] sm:$0xf]
        %v195 = vld [vmem:[%s168 + $0x64] sm:$0xf]
        %v196 = vld [vmem:[%s168 + $0x68] sm:$0xf]
        %v197 = vld [vmem:[%s168 + $0x6c] sm:$0xf]
        %v198 = vld [vmem:[%s168 + $0x70] sm:$0xf]
        %v199 = vld [vmem:[%s168 + $0x74] sm:$0xf]
        %v200 = vld [vmem:[%s168 + $0x78] sm:$0xf]
        %v201 = vld [vmem:[%s168 + $0x7c] sm:$0xf]
        %v202 = vld [vmem:[%s1] sm:$0xff]
        %v235 = vunpack.c.l.b16 %v170
        %v236 = vunpack.c.l.b16 %v171
        %v237 = vunpack.c.l.b16 %v172
        %v238 = vunpack.c.l.b16 %v173
        %v239 = vunpack.c.l.b16 %v174
        %v240 = vunpack.c.l.b16 %v175
        %v241 = vunpack.c.l.b16 %v176
        %v242 = vunpack.c.l.b16 %v177
        %v243 = vunpack.c.l.b16 %v178
        %v244 = vunpack.c.l.b16 %v179
        %v245 = vunpack.c.l.b16 %v180
        %v246 = vunpack.c.l.b16 %v181
        %v247 = vunpack.c.l.b16 %v182
        %v248 = vunpack.c.l.b16 %v183
        %v249 = vunpack.c.l.b16 %v184
        %v250 = vunpack.c.l.b16 %v185
        %v251 = vunpack.c.l.b16 %v186
        %v252 = vunpack.c.l.b16 %v187
        %v253 = vunpack.c.l.b16 %v188
        %v254 = vunpack.c.l.b16 %v189
        %v255 = vunpack.c.l.b16 %v190
        %v256 = vunpack.c.l.b16 %v191
        %v257 = vunpack.c.l.b16 %v192
        %v258 = vunpack.c.l.b16 %v193
        %v259 = vunpack.c.l.b16 %v194
        %v260 = vunpack.c.l.b16 %v195
        %v261 = vunpack.c.l.b16 %v196
        %v262 = vunpack.c.l.b16 %v197
        %v263 = vunpack.c.l.b16 %v198
        %v264 = vunpack.c.l.b16 %v199
        %v265 = vunpack.c.l.b16 %v200
        %v266 = vunpack.c.l.b16 %v201
        %v267 = vpack.c.b16 %v236, %v235
        %v268 = vpack.c.b16 %v238, %v237
        %v269 = vpack.c.b16 %v240, %v239
        %v270 = vpack.c.b16 %v242, %v241
        %v271 = vpack.c.b16 %v244, %v243
        %v272 = vpack.c.b16 %v246, %v245
        %v273 = vpack.c.b16 %v248, %v247
        %v274 = vpack.c.b16 %v250, %v249
        %v275 = vpack.c.b16 %v252, %v251
        %v276 = vpack.c.b16 %v254, %v253
        %v277 = vpack.c.b16 %v256, %v255
        %v278 = vpack.c.b16 %v258, %v257
        %v279 = vpack.c.b16 %v260, %v259
        %v280 = vpack.c.b16 %v262, %v261
        %v281 = vpack.c.b16 %v264, %v263
        %v282 = vpack.c.b16 %v266, %v265
        %v284 = vcombine.high %v202, %v202
        %v286 = vunpack.c.l.s4 1983009808
        %v287 = vunpack.c.0.s8 %v286
        %v288 = vlaneseq
        %v289 = vshrl.u32 %v288, 7
        %v290 = vsub.s32 %v287, %v289
        %v291 = vrot.slane %v202, %v290
        %v293 = vunpack.c.l.s4 1983009808
        %v294 = vunpack.c.0.s8 %v293
        %v295 = vlaneseq
        %v296 = vshrl.u32 %v295, 7
        %v297 = vsub.s32 %v294, %v296
        %v298 = vrot.slane %v284, %v297
        %v299 = vcombine.high %v291, %v291
        %v300 = vcombine.high %v298, %v298
        %vm301 = vcmask 23552
        %v303 = vsel %vm301, %v267, 0
        %v306 = vsel %vm301, %v268, 0
        %v309 = vsel %vm301, %v269, 0
        %v312 = vsel %vm301, %v270, 0
        %v315 = vsel %vm301, %v271, 0
        %v318 = vsel %vm301, %v272, 0
        %v321 = vsel %vm301, %v273, 0
        %v324 = vsel %vm301, %v274, 0
        %v327 = vsel %vm301, %v275, 0
        %v330 = vsel %vm301, %v276, 0
        %v333 = vsel %vm301, %v277, 0
        %v336 = vsel %vm301, %v278, 0
        %v339 = vsel %vm301, %v279, 0
        %v342 = vsel %vm301, %v280, 0
        %v345 = vsel %vm301, %v281, 0
        %v348 = vsel %vm301, %v282, 0
        %vm350 = vcmask 1040384
        %vm351 = vcmask 1041408
        %v352 = vsel %vm350, 4294967295, 65535
        %v353 = vsel %vm351, %v352, 0
        %v355 = vand.u32 %v291, %v353
        %v358 = vand.u32 %v299, %v353
        %v361 = vand.u32 %v298, %v353
        %v364 = vand.u32 %v300, %v353
        %366 = vmatprep.subr.bf16.mxu0 %v358
        %367 = vmatpush1.bf16.msra.mxu0 %v355
        %368 = vmatprep.subr.bf16.mxu0 0
        %369 = vmatpush1.bf16.msra.mxu0 0
        %370 = vmatprep.subr.bf16.mxu0 0
        %371 = vmatpush1.bf16.msra.mxu0 0
        %372 = vmatprep.subr.bf16.mxu0 0
        %373 = vmatpush1.bf16.msra.mxu0 0
        %374 = vmatprep.subr.bf16.mxu0 0
        %375 = vmatpush1.bf16.msra.mxu0 0
        %376 = vmatprep.subr.bf16.mxu0 0
        %377 = vmatpush1.bf16.msra.mxu0 0
        %378 = vmatprep.subr.bf16.mxu0 0
        %379 = vmatpush1.bf16.msra.mxu0 0
        %380 = vmatprep.subr.bf16.mxu0 0
        %381 = vmatpush1.bf16.msra.mxu0 0
        %382 = vmatprep.subr.bf16.mxu0 0
        %383 = vmatpush1.bf16.msra.mxu0 0
        %384 = vmatprep.subr.bf16.mxu0 0
        %385 = vmatpush1.bf16.msra.mxu0 0
        %386 = vmatprep.subr.bf16.mxu0 0
        %387 = vmatpush1.bf16.msra.mxu0 0
        %388 = vmatprep.subr.bf16.mxu0 0
        %389 = vmatpush1.bf16.msra.mxu0 0
        %390 = vmatprep.subr.bf16.mxu0 0
        %391 = vmatpush1.bf16.msra.mxu0 0
        %392 = vmatprep.subr.bf16.mxu0 0
        %393 = vmatpush1.bf16.msra.mxu0 0
        %394 = vmatprep.subr.bf16.mxu0 0
        %395 = vmatpush1.bf16.msra.mxu0 0
        %396 = vmatprep.subr.bf16.mxu0 0
        %397 = vmatpush1.bf16.msra.mxu0 0
        %398 = vmatprep.mubr.bf16.mxu0 0
        %399 = vmatmul.mubr.bf16.gmra.mrb[0].mxu0 %v303
        %v400 = vpop.f32.mrb[0].mxu0
        %v401 = vadd.f32 0.0, %v400
        %v402 = vpop.f32.mrb[0].mxu0
        %v403 = vadd.f32 0.0, %v402
        %v404 = vpop.f32.mrb[0].mxu0
        %v405 = vadd.f32 0.0, %v404
        %v406 = vpop.f32.mrb[0].mxu0
        %v407 = vadd.f32 0.0, %v406
        %408 = vmatprep.mubr.bf16.mxu0 0
        %409 = vmatmul.mubr.bf16.gmra.mrb[0].mxu0 %v306
        %v410 = vpop.f32.mrb[0].mxu0
        %v411 = vadd.f32 0.0, %v410
        %v412 = vpop.f32.mrb[0].mxu0
        %v413 = vadd.f32 0.0, %v412
        %v414 = vpop.f32.mrb[0].mxu0
        %v415 = vadd.f32 0.0, %v414
        %v416 = vpop.f32.mrb[0].mxu0
        %v417 = vadd.f32 0.0, %v416
        %418 = vmatprep.mubr.bf16.mxu0 0
        %419 = vmatmul.mubr.bf16.gmra.mrb[0].mxu0 %v309
        %v420 = vpop.f32.mrb[0].mxu0
        %v421 = vadd.f32 0.0, %v420
        %v422 = vpop.f32.mrb[0].mxu0
        %v423 = vadd.f32 0.0, %v422
        %v424 = vpop.f32.mrb[0].mxu0
        %v425 = vadd.f32 0.0, %v424
        %v426 = vpop.f32.mrb[0].mxu0
        %v427 = vadd.f32 0.0, %v426
        %428 = vmatprep.mubr.bf16.mxu0 0
        %429 = vmatmul.mubr.bf16.gmra.mrb[0].mxu0 %v312
        %v430 = vpop.f32.mrb[0].mxu0
        %v431 = vadd.f32 0.0, %v430
        %v432 = vpop.f32.mrb[0].mxu0
        %v433 = vadd.f32 0.0, %v432
        %v434 = vpop.f32.mrb[0].mxu0
        %v435 = vadd.f32 0.0, %v434
        %v436 = vpop.f32.mrb[0].mxu0
        %v437 = vadd.f32 0.0, %v436
        %438 = vmatprep.mubr.bf16.mxu0 0
        %439 = vmatmul.mubr.bf16.gmra.mrb[0].mxu0 %v315
        %v440 = vpop.f32.mrb[0].mxu0
        %v441 = vadd.f32 0.0, %v440
        %v442 = vpop.f32.mrb[0].mxu0
        %v443 = vadd.f32 0.0, %v442
        %v444 = vpop.f32.mrb[0].mxu0
        %v445 = vadd.f32 0.0, %v444
        %v446 = vpop.f32.mrb[0].mxu0
        %v447 = vadd.f32 0.0, %v446
        %448 = vmatprep.mubr.bf16.mxu0 0
        %449 = vmatmul.mubr.bf16.gmra.mrb[0].mxu0 %v318
        %v450 = vpop.f32.mrb[0].mxu0
        %v451 = vadd.f32 0.0, %v450
        %v452 = vpop.f32.mrb[0].mxu0
        %v453 = vadd.f32 0.0, %v452
        %v454 = vpop.f32.mrb[0].mxu0
        %v455 = vadd.f32 0.0, %v454
        %v456 = vpop.f32.mrb[0].mxu0
        %v457 = vadd.f32 0.0, %v456
        %458 = vmatprep.mubr.bf16.mxu0 0
        %459 = vmatmul.mubr.bf16.gmra.mrb[0].mxu0 %v321
        %v460 = vpop.f32.mrb[0].mxu0
        %v461 = vadd.f32 0.0, %v460
        %v462 = vpop.f32.mrb[0].mxu0
        %v463 = vadd.f32 0.0, %v462
        %v464 = vpop.f32.mrb[0].mxu0
        %v465 = vadd.f32 0.0, %v464
        %v466 = vpop.f32.mrb[0].mxu0
        %v467 = vadd.f32 0.0, %v466
        %468 = vmatprep.mubr.bf16.mxu0 0
        %469 = vmatmul.mubr.bf16.gmra.mrb[0].mxu0 %v324
        %v470 = vpop.f32.mrb[0].mxu0
        %v471 = vadd.f32 0.0, %v470
        %v472 = vpop.f32.mrb[0].mxu0
        %v473 = vadd.f32 0.0, %v472
        %v474 = vpop.f32.mrb[0].mxu0
        %v475 = vadd.f32 0.0, %v474
        %v476 = vpop.f32.mrb[0].mxu0
        %v477 = vadd.f32 0.0, %v476
        %478 = vmatprep.mubr.bf16.mxu0 0
        %479 = vmatmul.mubr.bf16.gmra.mrb[0].mxu0 %v327
        %v480 = vpop.f32.mrb[0].mxu0
        %v481 = vadd.f32 0.0, %v480
        %v482 = vpop.f32.mrb[0].mxu0
        %v483 = vadd.f32 0.0, %v482
        %v484 = vpop.f32.mrb[0].mxu0
        %v485 = vadd.f32 0.0, %v484
        %v486 = vpop.f32.mrb[0].mxu0
        %v487 = vadd.f32 0.0, %v486
        %488 = vmatprep.mubr.bf16.mxu0 0
        %489 = vmatmul.mubr.bf16.gmra.mrb[0].mxu0 %v330
        %v490 = vpop.f32.mrb[0].mxu0
        %v491 = vadd.f32 0.0, %v490
        %v492 = vpop.f32.mrb[0].mxu0
        %v493 = vadd.f32 0.0, %v492
        %v494 = vpop.f32.mrb[0].mxu0
        %v495 = vadd.f32 0.0, %v494
        %v496 = vpop.f32.mrb[0].mxu0
        %v497 = vadd.f32 0.0, %v496
        %498 = vmatprep.mubr.bf16.mxu0 0
        %499 = vmatmul.mubr.bf16.gmra.mrb[0].mxu0 %v333
        %v500 = vpop.f32.mrb[0].mxu0
        %v501 = vadd.f32 0.0, %v500
        %v502 = vpop.f32.mrb[0].mxu0
        %v503 = vadd.f32 0.0, %v502
        %v504 = vpop.f32.mrb[0].mxu0
        %v505 = vadd.f32 0.0, %v504
        %v506 = vpop.f32.mrb[0].mxu0
        %v507 = vadd.f32 0.0, %v506
        %508 = vmatprep.mubr.bf16.mxu0 0
        %509 = vmatmul.mubr.bf16.gmra.mrb[0].mxu0 %v336
        %v510 = vpop.f32.mrb[0].mxu0
        %v511 = vadd.f32 0.0, %v510
        %v512 = vpop.f32.mrb[0].mxu0
        %v513 = vadd.f32 0.0, %v512
        %v514 = vpop.f32.mrb[0].mxu0
        %v515 = vadd.f32 0.0, %v514
        %v516 = vpop.f32.mrb[0].mxu0
        %v517 = vadd.f32 0.0, %v516
        %518 = vmatprep.mubr.bf16.mxu0 0
        %519 = vmatmul.mubr.bf16.gmra.mrb[0].mxu0 %v339
        %v520 = vpop.f32.mrb[0].mxu0
        %v521 = vadd.f32 0.0, %v520
        %v522 = vpop.f32.mrb[0].mxu0
        %v523 = vadd.f32 0.0, %v522
        %v524 = vpop.f32.mrb[0].mxu0
        %v525 = vadd.f32 0.0, %v524
        %v526 = vpop.f32.mrb[0].mxu0
        %v527 = vadd.f32 0.0, %v526
        %528 = vmatprep.mubr.bf16.mxu0 0
        %529 = vmatmul.mubr.bf16.gmra.mrb[0].mxu0 %v342
        %v530 = vpop.f32.mrb[0].mxu0
        %v531 = vadd.f32 0.0, %v530
        %v532 = vpop.f32.mrb[0].mxu0
        %v533 = vadd.f32 0.0, %v532
        %v534 = vpop.f32.mrb[0].mxu0
        %v535 = vadd.f32 0.0, %v534
        %v536 = vpop.f32.mrb[0].mxu0
        %v537 = vadd.f32 0.0, %v536
        %538 = vmatprep.mubr.bf16.mxu0 0
        %539 = vmatmul.mubr.bf16.gmra.mrb[0].mxu0 %v345
        %v540 = vpop.f32.mrb[0].mxu0
        %v541 = vadd.f32 0.0, %v540
        %v542 = vpop.f32.mrb[0].mxu0
        %v543 = vadd.f32 0.0, %v542
        %v544 = vpop.f32.mrb[0].mxu0
        %v545 = vadd.f32 0.0, %v544
        %v546 = vpop.f32.mrb[0].mxu0
        %v547 = vadd.f32 0.0, %v546
        %548 = vmatprep.mubr.bf16.mxu0 0
        %549 = vmatmul.mubr.bf16.gmra.mrb[0].mxu0 %v348
        %v550 = vpop.f32.mrb[0].mxu0
        %v551 = vadd.f32 0.0, %v550
        %v552 = vpop.f32.mrb[0].mxu0
        %v553 = vadd.f32 0.0, %v552
        %v554 = vpop.f32.mrb[0].mxu0
        %v555 = vadd.f32 0.0, %v554
        %v556 = vpop.f32.mrb[0].mxu0
        %v557 = vadd.f32 0.0, %v556
        %558 = vdwg.mxu0
        %559 = vmatprep.subr.bf16.mxu0 %v364
        %560 = vmatpush1.bf16.msra.mxu0 %v361
        %561 = vmatprep.subr.bf16.mxu0 0
        %562 = vmatpush1.bf16.msra.mxu0 0
        %563 = vmatprep.subr.bf16.mxu0 0
        %564 = vmatpush1.bf16.msra.mxu0 0
        %565 = vmatprep.subr.bf16.mxu0 0
        %566 = vmatpush1.bf16.msra.mxu0 0
        %567 = vmatprep.subr.bf16.mxu0 0
        %568 = vmatpush1.bf16.msra.mxu0 0
        %569 = vmatprep.subr.bf16.mxu0 0
        %570 = vmatpush1.bf16.msra.mxu0 0
        %571 = vmatprep.subr.bf16.mxu0 0
        %572 = vmatpush1.bf16.msra.mxu0 0
        %573 = vmatprep.subr.bf16.mxu0 0
        %574 = vmatpush1.bf16.msra.mxu0 0
        %575 = vmatprep.subr.bf16.mxu0 0
        %576 = vmatpush1.bf16.msra.mxu0 0
        %577 = vmatprep.subr.bf16.mxu0 0
        %578 = vmatpush1.bf16.msra.mxu0 0
        %579 = vmatprep.subr.bf16.mxu0 0
        %580 = vmatpush1.bf16.msra.mxu0 0
        %581 = vmatprep.subr.bf16.mxu0 0
        %582 = vmatpush1.bf16.msra.mxu0 0
        %583 = vmatprep.subr.bf16.mxu0 0
        %584 = vmatpush1.bf16.msra.mxu0 0
        %585 = vmatprep.subr.bf16.mxu0 0
        %586 = vmatpush1.bf16.msra.mxu0 0
        %587 = vmatprep.subr.bf16.mxu0 0
        %588 = vmatpush1.bf16.msra.mxu0 0
        %589 = vmatprep.subr.bf16.mxu0 0
        %590 = vmatpush1.bf16.msra.mxu0 0
        %591 = vmatprep.mubr.bf16.mxu0 0
        %592 = vmatmul.mubr.bf16.gmra.mrb[0].mxu0 %v303
        %v593 = vpop.f32.mrb[0].mxu0
        %v594 = vadd.f32 0.0, %v593
        %v595 = vpop.f32.mrb[0].mxu0
        %v596 = vadd.f32 0.0, %v595
        %v597 = vpop.f32.mrb[0].mxu0
        %v598 = vadd.f32 0.0, %v597
        %v599 = vpop.f32.mrb[0].mxu0
        %v600 = vadd.f32 0.0, %v599
        %601 = vmatprep.mubr.bf16.mxu0 0
        %602 = vmatmul.mubr.bf16.gmra.mrb[0].mxu0 %v306
        %v603 = vpop.f32.mrb[0].mxu0
        %v604 = vadd.f32 0.0, %v603
        %v605 = vpop.f32.mrb[0].mxu0
        %v606 = vadd.f32 0.0, %v605
        %v607 = vpop.f32.mrb[0].mxu0
        %v608 = vadd.f32 0.0, %v607
        %v609 = vpop.f32.mrb[0].mxu0
        %v610 = vadd.f32 0.0, %v609
        %611 = vmatprep.mubr.bf16.mxu0 0
        %612 = vmatmul.mubr.bf16.gmra.mrb[0].mxu0 %v309
        %v613 = vpop.f32.mrb[0].mxu0
        %v614 = vadd.f32 0.0, %v613
        %v615 = vpop.f32.mrb[0].mxu0
        %v616 = vadd.f32 0.0, %v615
        %v617 = vpop.f32.mrb[0].mxu0
        %v618 = vadd.f32 0.0, %v617
        %v619 = vpop.f32.mrb[0].mxu0
        %v620 = vadd.f32 0.0, %v619
        %621 = vmatprep.mubr.bf16.mxu0 0
        %622 = vmatmul.mubr.bf16.gmra.mrb[0].mxu0 %v312
        %v623 = vpop.f32.mrb[0].mxu0
        %v624 = vadd.f32 0.0, %v623
        %v625 = vpop.f32.mrb[0].mxu0
        %v626 = vadd.f32 0.0, %v625
        %v627 = vpop.f32.mrb[0].mxu0
        %v628 = vadd.f32 0.0, %v627
        %v629 = vpop.f32.mrb[0].mxu0
        %v630 = vadd.f32 0.0, %v629
        %631 = vmatprep.mubr.bf16.mxu0 0
        %632 = vmatmul.mubr.bf16.gmra.mrb[0].mxu0 %v315
        %v633 = vpop.f32.mrb[0].mxu0
        %v634 = vadd.f32 0.0, %v633
        %v635 = vpop.f32.mrb[0].mxu0
        %v636 = vadd.f32 0.0, %v635
        %v637 = vpop.f32.mrb[0].mxu0
        %v638 = vadd.f32 0.0, %v637
        %v639 = vpop.f32.mrb[0].mxu0
        %v640 = vadd.f32 0.0, %v639
        %641 = vmatprep.mubr.bf16.mxu0 0
        %642 = vmatmul.mubr.bf16.gmra.mrb[0].mxu0 %v318
        %v643 = vpop.f32.mrb[0].mxu0
        %v644 = vadd.f32 0.0, %v643
        %v645 = vpop.f32.mrb[0].mxu0
        %v646 = vadd.f32 0.0, %v645
        %v647 = vpop.f32.mrb[0].mxu0
        %v648 = vadd.f32 0.0, %v647
        %v649 = vpop.f32.mrb[0].mxu0
        %v650 = vadd.f32 0.0, %v649
        %651 = vmatprep.mubr.bf16.mxu0 0
        %652 = vmatmul.mubr.bf16.gmra.mrb[0].mxu0 %v321
        %v653 = vpop.f32.mrb[0].mxu0
        %v654 = vadd.f32 0.0, %v653
        %v655 = vpop.f32.mrb[0].mxu0
        %v656 = vadd.f32 0.0, %v655
        %v657 = vpop.f32.mrb[0].mxu0
        %v658 = vadd.f32 0.0, %v657
        %v659 = vpop.f32.mrb[0].mxu0
        %v660 = vadd.f32 0.0, %v659
        %661 = vmatprep.mubr.bf16.mxu0 0
        %662 = vmatmul.mubr.bf16.gmra.mrb[0].mxu0 %v324
        %v663 = vpop.f32.mrb[0].mxu0
        %v664 = vadd.f32 0.0, %v663
        %v665 = vpop.f32.mrb[0].mxu0
        %v666 = vadd.f32 0.0, %v665
        %v667 = vpop.f32.mrb[0].mxu0
        %v668 = vadd.f32 0.0, %v667
        %v669 = vpop.f32.mrb[0].mxu0
        %v670 = vadd.f32 0.0, %v669
        %671 = vmatprep.mubr.bf16.mxu0 0
        %672 = vmatmul.mubr.bf16.gmra.mrb[0].mxu0 %v327
        %v673 = vpop.f32.mrb[0].mxu0
        %v674 = vadd.f32 0.0, %v673
        %v675 = vpop.f32.mrb[0].mxu0
        %v676 = vadd.f32 0.0, %v675
        %v677 = vpop.f32.mrb[0].mxu0
        %v678 = vadd.f32 0.0, %v677
        %v679 = vpop.f32.mrb[0].mxu0
        %v680 = vadd.f32 0.0, %v679
        %681 = vmatprep.mubr.bf16.mxu0 0
        %682 = vmatmul.mubr.bf16.gmra.mrb[0].mxu0 %v330
        %v683 = vpop.f32.mrb[0].mxu0
        %v684 = vadd.f32 0.0, %v683
        %v685 = vpop.f32.mrb[0].mxu0
        %v686 = vadd.f32 0.0, %v685
        %v687 = vpop.f32.mrb[0].mxu0
        %v688 = vadd.f32 0.0, %v687
        %v689 = vpop.f32.mrb[0].mxu0
        %v690 = vadd.f32 0.0, %v689
        %691 = vmatprep.mubr.bf16.mxu0 0
        %692 = vmatmul.mubr.bf16.gmra.mrb[0].mxu0 %v333
        %v693 = vpop.f32.mrb[0].mxu0
        %v694 = vadd.f32 0.0, %v693
        %v695 = vpop.f32.mrb[0].mxu0
        %v696 = vadd.f32 0.0, %v695
        %v697 = vpop.f32.mrb[0].mxu0
        %v698 = vadd.f32 0.0, %v697
        %v699 = vpop.f32.mrb[0].mxu0
        %v700 = vadd.f32 0.0, %v699
        %701 = vmatprep.mubr.bf16.mxu0 0
        %702 = vmatmul.mubr.bf16.gmra.mrb[0].mxu0 %v336
        %v703 = vpop.f32.mrb[0].mxu0
        %v704 = vadd.f32 0.0, %v703
        %v705 = vpop.f32.mrb[0].mxu0
        %v706 = vadd.f32 0.0, %v705
        %v707 = vpop.f32.mrb[0].mxu0
        %v708 = vadd.f32 0.0, %v707
        %v709 = vpop.f32.mrb[0].mxu0
        %v710 = vadd.f32 0.0, %v709
        %711 = vmatprep.mubr.bf16.mxu0 0
        %712 = vmatmul.mubr.bf16.gmra.mrb[0].mxu0 %v339
        %v713 = vpop.f32.mrb[0].mxu0
        %v714 = vadd.f32 0.0, %v713
        %v715 = vpop.f32.mrb[0].mxu0
        %v716 = vadd.f32 0.0, %v715
        %v717 = vpop.f32.mrb[0].mxu0
        %v718 = vadd.f32 0.0, %v717
        %v719 = vpop.f32.mrb[0].mxu0
        %v720 = vadd.f32 0.0, %v719
        %721 = vmatprep.mubr.bf16.mxu0 0
        %722 = vmatmul.mubr.bf16.gmra.mrb[0].mxu0 %v342
        %v723 = vpop.f32.mrb[0].mxu0
        %v724 = vadd.f32 0.0, %v723
        %v725 = vpop.f32.mrb[0].mxu0
        %v726 = vadd.f32 0.0, %v725
        %v727 = vpop.f32.mrb[0].mxu0
        %v728 = vadd.f32 0.0, %v727
        %v729 = vpop.f32.mrb[0].mxu0
        %v730 = vadd.f32 0.0, %v729
        %731 = vmatprep.mubr.bf16.mxu0 0
        %732 = vmatmul.mubr.bf16.gmra.mrb[0].mxu0 %v345
        %v733 = vpop.f32.mrb[0].mxu0
        %v734 = vadd.f32 0.0, %v733
        %v735 = vpop.f32.mrb[0].mxu0
        %v736 = vadd.f32 0.0, %v735
        %v737 = vpop.f32.mrb[0].mxu0
        %v738 = vadd.f32 0.0, %v737
        %v739 = vpop.f32.mrb[0].mxu0
        %v740 = vadd.f32 0.0, %v739
        %741 = vmatprep.mubr.bf16.mxu0 0
        %742 = vmatmul.mubr.bf16.gmra.mrb[0].mxu0 %v348
        %v743 = vpop.f32.mrb[0].mxu0
        %v744 = vadd.f32 0.0, %v743
        %v745 = vpop.f32.mrb[0].mxu0
        %v746 = vadd.f32 0.0, %v745
        %v747 = vpop.f32.mrb[0].mxu0
        %v748 = vadd.f32 0.0, %v747
        %v749 = vpop.f32.mrb[0].mxu0
        %v750 = vadd.f32 0.0, %v749
        %751 = vdwg.mxu0
        %v752 = vmul.f32 %v401, 0.57735026
        %v753 = vmul.f32 %v403, 0.57735026
        %v754 = vmul.f32 %v594, 0.57735026
        %v755 = vmul.f32 %v596, 0.57735026
        %v756 = vmul.f32 %v405, 0.57735026
        %v757 = vmul.f32 %v407, 0.57735026
        %v758 = vmul.f32 %v598, 0.57735026
        %v759 = vmul.f32 %v600, 0.57735026
        %v760 = vmul.f32 %v411, 0.57735026
        %v761 = vmul.f32 %v413, 0.57735026
        %v762 = vmul.f32 %v604, 0.57735026
        %v763 = vmul.f32 %v606, 0.57735026
        %v764 = vmul.f32 %v415, 0.57735026
        %v765 = vmul.f32 %v417, 0.57735026
        %v766 = vmul.f32 %v608, 0.57735026
        %v767 = vmul.f32 %v610, 0.57735026
        %v768 = vmul.f32 %v421, 0.57735026
        %v769 = vmul.f32 %v423, 0.57735026
        %v770 = vmul.f32 %v614, 0.57735026
        %v771 = vmul.f32 %v616, 0.57735026
        %v772 = vmul.f32 %v425, 0.57735026
        %v773 = vmul.f32 %v427, 0.57735026
        %v774 = vmul.f32 %v618, 0.57735026
        %v775 = vmul.f32 %v620, 0.57735026
        %v776 = vmul.f32 %v431, 0.57735026
        %v777 = vmul.f32 %v433, 0.57735026
        %v778 = vmul.f32 %v624, 0.57735026
        %v779 = vmul.f32 %v626, 0.57735026
        %v780 = vmul.f32 %v435, 0.57735026
        %v781 = vmul.f32 %v437, 0.57735026
        %v782 = vmul.f32 %v628, 0.57735026
        %v783 = vmul.f32 %v630, 0.57735026
        %v784 = vmul.f32 %v441, 0.57735026
        %v785 = vmul.f32 %v443, 0.57735026
        %v786 = vmul.f32 %v634, 0.57735026
        %v787 = vmul.f32 %v636, 0.57735026
        %v788 = vmul.f32 %v445, 0.57735026
        %v789 = vmul.f32 %v447, 0.57735026
        %v790 = vmul.f32 %v638, 0.57735026
        %v791 = vmul.f32 %v640, 0.57735026
        %v792 = vmul.f32 %v451, 0.57735026
        %v793 = vmul.f32 %v453, 0.57735026
        %v794 = vmul.f32 %v644, 0.57735026
        %v795 = vmul.f32 %v646, 0.57735026
        %v796 = vmul.f32 %v455, 0.57735026
        %v797 = vmul.f32 %v457, 0.57735026
        %v798 = vmul.f32 %v648, 0.57735026
        %v799 = vmul.f32 %v650, 0.57735026
        %v800 = vmul.f32 %v461, 0.57735026
        %v801 = vmul.f32 %v463, 0.57735026
        %v802 = vmul.f32 %v654, 0.57735026
        %v803 = vmul.f32 %v656, 0.57735026
        %v804 = vmul.f32 %v465, 0.57735026
        %v805 = vmul.f32 %v467, 0.57735026
        %v806 = vmul.f32 %v658, 0.57735026
        %v807 = vmul.f32 %v660, 0.57735026
        %v808 = vmul.f32 %v471, 0.57735026
        %v809 = vmul.f32 %v473, 0.57735026
        %v810 = vmul.f32 %v664, 0.57735026
        %v811 = vmul.f32 %v666, 0.57735026
        %v812 = vmul.f32 %v475, 0.57735026
        %v813 = vmul.f32 %v477, 0.57735026
        %v814 = vmul.f32 %v668, 0.57735026
        %v815 = vmul.f32 %v670, 0.57735026
        %v816 = vmul.f32 %v481, 0.57735026
        %v817 = vmul.f32 %v483, 0.57735026
        %v818 = vmul.f32 %v674, 0.57735026
        %v819 = vmul.f32 %v676, 0.57735026
        %v820 = vmul.f32 %v485, 0.57735026
        %v821 = vmul.f32 %v487, 0.57735026
        %v822 = vmul.f32 %v678, 0.57735026
        %v823 = vmul.f32 %v680, 0.57735026
        %v824 = vmul.f32 %v491, 0.57735026
        %v825 = vmul.f32 %v493, 0.57735026
        %v826 = vmul.f32 %v684, 0.57735026
        %v827 = vmul.f32 %v686, 0.57735026
        %v828 = vmul.f32 %v495, 0.57735026
        %v829 = vmul.f32 %v497, 0.57735026
        %v830 = vmul.f32 %v688, 0.57735026
        %v831 = vmul.f32 %v690, 0.57735026
        %v832 = vmul.f32 %v501, 0.57735026
        %v833 = vmul.f32 %v503, 0.57735026
        %v834 = vmul.f32 %v694, 0.57735026
        %v835 = vmul.f32 %v696, 0.57735026
        %v836 = vmul.f32 %v505, 0.57735026
        %v837 = vmul.f32 %v507, 0.57735026
        %v838 = vmul.f32 %v698, 0.57735026
        %v839 = vmul.f32 %v700, 0.57735026
        %v840 = vmul.f32 %v511, 0.57735026
        %v841 = vmul.f32 %v513, 0.57735026
        %v842 = vmul.f32 %v704, 0.57735026
        %v843 = vmul.f32 %v706, 0.57735026
        %v844 = vmul.f32 %v515, 0.57735026
        %v845 = vmul.f32 %v517, 0.57735026
        %v846 = vmul.f32 %v708, 0.57735026
        %v847 = vmul.f32 %v710, 0.57735026
        %v848 = vmul.f32 %v521, 0.57735026
        %v849 = vmul.f32 %v523, 0.57735026
        %v850 = vmul.f32 %v714, 0.57735026
        %v851 = vmul.f32 %v716, 0.57735026
        %v852 = vmul.f32 %v525, 0.57735026
        %v853 = vmul.f32 %v527, 0.57735026
        %v854 = vmul.f32 %v718, 0.57735026
        %v855 = vmul.f32 %v720, 0.57735026
        %v856 = vmul.f32 %v531, 0.57735026
        %v857 = vmul.f32 %v533, 0.57735026
        %v858 = vmul.f32 %v724, 0.57735026
        %v859 = vmul.f32 %v726, 0.57735026
        %v860 = vmul.f32 %v535, 0.57735026
        %v861 = vmul.f32 %v537, 0.57735026
        %v862 = vmul.f32 %v728, 0.57735026
        %v863 = vmul.f32 %v730, 0.57735026
        %v864 = vmul.f32 %v541, 0.57735026
        %v865 = vmul.f32 %v543, 0.57735026
        %v866 = vmul.f32 %v734, 0.57735026
        %v867 = vmul.f32 %v736, 0.57735026
        %v868 = vmul.f32 %v545, 0.57735026
        %v869 = vmul.f32 %v547, 0.57735026
        %v870 = vmul.f32 %v738, 0.57735026
        %v871 = vmul.f32 %v740, 0.57735026
        %v872 = vmul.f32 %v551, 0.57735026
        %v873 = vmul.f32 %v553, 0.57735026
        %v874 = vmul.f32 %v744, 0.57735026
        %v875 = vmul.f32 %v746, 0.57735026
        %v876 = vmul.f32 %v555, 0.57735026
        %v877 = vmul.f32 %v557, 0.57735026
        %v878 = vmul.f32 %v748, 0.57735026
        %v879 = vmul.f32 %v750, 0.57735026
        %v880 = vld [vmem:[%s2] sm:$0xf]
        %v882 = vlaneseq
        %v883 = vshrl.u32 %v882, 7
        %v884 = vsub.s32 0, %v883
        %v885 = vrot.slane %v880, %v884
        %v886 = vlaneseq
        %v887 = vshrl.u32 %v886, 7
        %v888 = vsub.s32 1, %v887
        %v889 = vrot.slane %v880, %v888
        %v890 = vlaneseq
        %v891 = vshrl.u32 %v890, 7
        %v892 = vsub.s32 2, %v891
        %v893 = vrot.slane %v880, %v892
        %v894 = vlaneseq
        %v895 = vshrl.u32 %v894, 7
        %v896 = vsub.s32 3, %v895
        %v897 = vrot.slane %v880, %v896
        %v902 = vadd.f32 %v752, %v885
        %v903 = vadd.f32 %v753, %v889
        %v904 = vadd.f32 %v754, %v893
        %v905 = vadd.f32 %v755, %v897
        %v906 = vadd.f32 %v756, %v885
        %v907 = vadd.f32 %v757, %v889
        %v908 = vadd.f32 %v758, %v893
        %v909 = vadd.f32 %v759, %v897
        %v910 = vadd.f32 %v760, %v885
        %v911 = vadd.f32 %v761, %v889
        %v912 = vadd.f32 %v762, %v893
        %v913 = vadd.f32 %v763, %v897
        %v914 = vadd.f32 %v764, %v885
        %v915 = vadd.f32 %v765, %v889
        %v916 = vadd.f32 %v766, %v893
        %v917 = vadd.f32 %v767, %v897
        %v918 = vadd.f32 %v768, %v885
        %v919 = vadd.f32 %v769, %v889
        %v920 = vadd.f32 %v770, %v893
        %v921 = vadd.f32 %v771, %v897
        %v922 = vadd.f32 %v772, %v885
        %v923 = vadd.f32 %v773, %v889
        %v924 = vadd.f32 %v774, %v893
        %v925 = vadd.f32 %v775, %v897
        %v926 = vadd.f32 %v776, %v885
        %v927 = vadd.f32 %v777, %v889
        %v928 = vadd.f32 %v778, %v893
        %v929 = vadd.f32 %v779, %v897
        %v930 = vadd.f32 %v780, %v885
        %v931 = vadd.f32 %v781, %v889
        %v932 = vadd.f32 %v782, %v893
        %v933 = vadd.f32 %v783, %v897
        %v934 = vadd.f32 %v784, %v885
        %v935 = vadd.f32 %v785, %v889
        %v936 = vadd.f32 %v786, %v893
        %v937 = vadd.f32 %v787, %v897
        %v938 = vadd.f32 %v788, %v885
        %v939 = vadd.f32 %v789, %v889
        %v940 = vadd.f32 %v790, %v893
        %v941 = vadd.f32 %v791, %v897
        %v942 = vadd.f32 %v792, %v885
        %v943 = vadd.f32 %v793, %v889
        %v944 = vadd.f32 %v794, %v893
        %v945 = vadd.f32 %v795, %v897
        %v946 = vadd.f32 %v796, %v885
        %v947 = vadd.f32 %v797, %v889
        %v948 = vadd.f32 %v798, %v893
        %v949 = vadd.f32 %v799, %v897
        %v950 = vadd.f32 %v800, %v885
        %v951 = vadd.f32 %v801, %v889
        %v952 = vadd.f32 %v802, %v893
        %v953 = vadd.f32 %v803, %v897
        %v954 = vadd.f32 %v804, %v885
        %v955 = vadd.f32 %v805, %v889
        %v956 = vadd.f32 %v806, %v893
        %v957 = vadd.f32 %v807, %v897
        %v958 = vadd.f32 %v808, %v885
        %v959 = vadd.f32 %v809, %v889
        %v960 = vadd.f32 %v810, %v893
        %v961 = vadd.f32 %v811, %v897
        %v962 = vadd.f32 %v812, %v885
        %v963 = vadd.f32 %v813, %v889
        %v964 = vadd.f32 %v814, %v893
        %v965 = vadd.f32 %v815, %v897
        %v966 = vadd.f32 %v816, %v885
        %v967 = vadd.f32 %v817, %v889
        %v968 = vadd.f32 %v818, %v893
        %v969 = vadd.f32 %v819, %v897
        %v970 = vadd.f32 %v820, %v885
        %v971 = vadd.f32 %v821, %v889
        %v972 = vadd.f32 %v822, %v893
        %v973 = vadd.f32 %v823, %v897
        %v974 = vadd.f32 %v824, %v885
        %v975 = vadd.f32 %v825, %v889
        %v976 = vadd.f32 %v826, %v893
        %v977 = vadd.f32 %v827, %v897
        %v978 = vadd.f32 %v828, %v885
        %v979 = vadd.f32 %v829, %v889
        %v980 = vadd.f32 %v830, %v893
        %v981 = vadd.f32 %v831, %v897
        %v982 = vadd.f32 %v832, %v885
        %v983 = vadd.f32 %v833, %v889
        %v984 = vadd.f32 %v834, %v893
        %v985 = vadd.f32 %v835, %v897
        %v986 = vadd.f32 %v836, %v885
        %v987 = vadd.f32 %v837, %v889
        %v988 = vadd.f32 %v838, %v893
        %v989 = vadd.f32 %v839, %v897
        %v990 = vadd.f32 %v840, %v885
        %v991 = vadd.f32 %v841, %v889
        %v992 = vadd.f32 %v842, %v893
        %v993 = vadd.f32 %v843, %v897
        %v994 = vadd.f32 %v844, %v885
        %v995 = vadd.f32 %v845, %v889
        %v996 = vadd.f32 %v846, %v893
        %v997 = vadd.f32 %v847, %v897
        %v998 = vadd.f32 %v848, %v885
        %v999 = vadd.f32 %v849, %v889
        %v1000 = vadd.f32 %v850, %v893
        %v1001 = vadd.f32 %v851, %v897
        %v1002 = vadd.f32 %v852, %v885
        %v1003 = vadd.f32 %v853, %v889
        %v1004 = vadd.f32 %v854, %v893
        %v1005 = vadd.f32 %v855, %v897
        %v1006 = vadd.f32 %v856, %v885
        %v1007 = vadd.f32 %v857, %v889
        %v1008 = vadd.f32 %v858, %v893
        %v1009 = vadd.f32 %v859, %v897
        %v1010 = vadd.f32 %v860, %v885
        %v1011 = vadd.f32 %v861, %v889
        %v1012 = vadd.f32 %v862, %v893
        %v1013 = vadd.f32 %v863, %v897
        %v1014 = vadd.f32 %v864, %v885
        %v1015 = vadd.f32 %v865, %v889
        %v1016 = vadd.f32 %v866, %v893
        %v1017 = vadd.f32 %v867, %v897
        %v1018 = vadd.f32 %v868, %v885
        %v1019 = vadd.f32 %v869, %v889
        %v1020 = vadd.f32 %v870, %v893
        %v1021 = vadd.f32 %v871, %v897
        %v1022 = vadd.f32 %v872, %v885
        %v1023 = vadd.f32 %v873, %v889
        %v1024 = vadd.f32 %v874, %v893
        %v1025 = vadd.f32 %v875, %v897
        %v1026 = vadd.f32 %v876, %v885
        %v1027 = vadd.f32 %v877, %v889
        %v1028 = vadd.f32 %v878, %v893
        %v1029 = vadd.f32 %v879, %v897
        %vm1030 = vcmp.ge.f32.partialorder %v902, 0.0
        %vm1031 = vcmp.ge.f32.partialorder %v903, 0.0
        %vm1032 = vcmp.ge.f32.partialorder %v904, 0.0
        %vm1033 = vcmp.ge.f32.partialorder %v905, 0.0
        %vm1034 = vcmp.ge.f32.partialorder %v906, 0.0
        %vm1035 = vcmp.ge.f32.partialorder %v907, 0.0
        %vm1036 = vcmp.ge.f32.partialorder %v908, 0.0
        %vm1037 = vcmp.ge.f32.partialorder %v909, 0.0
        %vm1038 = vcmp.ge.f32.partialorder %v910, 0.0
        %vm1039 = vcmp.ge.f32.partialorder %v911, 0.0
        %vm1040 = vcmp.ge.f32.partialorder %v912, 0.0
        %vm1041 = vcmp.ge.f32.partialorder %v913, 0.0
        %vm1042 = vcmp.ge.f32.partialorder %v914, 0.0
        %vm1043 = vcmp.ge.f32.partialorder %v915, 0.0
        %vm1044 = vcmp.ge.f32.partialorder %v916, 0.0
        %vm1045 = vcmp.ge.f32.partialorder %v917, 0.0
        %vm1046 = vcmp.ge.f32.partialorder %v918, 0.0
        %vm1047 = vcmp.ge.f32.partialorder %v919, 0.0
        %vm1048 = vcmp.ge.f32.partialorder %v920, 0.0
        %vm1049 = vcmp.ge.f32.partialorder %v921, 0.0
        %vm1050 = vcmp.ge.f32.partialorder %v922, 0.0
        %vm1051 = vcmp.ge.f32.partialorder %v923, 0.0
        %vm1052 = vcmp.ge.f32.partialorder %v924, 0.0
        %vm1053 = vcmp.ge.f32.partialorder %v925, 0.0
        %vm1054 = vcmp.ge.f32.partialorder %v926, 0.0
        %vm1055 = vcmp.ge.f32.partialorder %v927, 0.0
        %vm1056 = vcmp.ge.f32.partialorder %v928, 0.0
        %vm1057 = vcmp.ge.f32.partialorder %v929, 0.0
        %vm1058 = vcmp.ge.f32.partialorder %v930, 0.0
        %vm1059 = vcmp.ge.f32.partialorder %v931, 0.0
        %vm1060 = vcmp.ge.f32.partialorder %v932, 0.0
        %vm1061 = vcmp.ge.f32.partialorder %v933, 0.0
        %vm1062 = vcmp.ge.f32.partialorder %v934, 0.0
        %vm1063 = vcmp.ge.f32.partialorder %v935, 0.0
        %vm1064 = vcmp.ge.f32.partialorder %v936, 0.0
        %vm1065 = vcmp.ge.f32.partialorder %v937, 0.0
        %vm1066 = vcmp.ge.f32.partialorder %v938, 0.0
        %vm1067 = vcmp.ge.f32.partialorder %v939, 0.0
        %vm1068 = vcmp.ge.f32.partialorder %v940, 0.0
        %vm1069 = vcmp.ge.f32.partialorder %v941, 0.0
        %vm1070 = vcmp.ge.f32.partialorder %v942, 0.0
        %vm1071 = vcmp.ge.f32.partialorder %v943, 0.0
        %vm1072 = vcmp.ge.f32.partialorder %v944, 0.0
        %vm1073 = vcmp.ge.f32.partialorder %v945, 0.0
        %vm1074 = vcmp.ge.f32.partialorder %v946, 0.0
        %vm1075 = vcmp.ge.f32.partialorder %v947, 0.0
        %vm1076 = vcmp.ge.f32.partialorder %v948, 0.0
        %vm1077 = vcmp.ge.f32.partialorder %v949, 0.0
        %vm1078 = vcmp.ge.f32.partialorder %v950, 0.0
        %vm1079 = vcmp.ge.f32.partialorder %v951, 0.0
        %vm1080 = vcmp.ge.f32.partialorder %v952, 0.0
        %vm1081 = vcmp.ge.f32.partialorder %v953, 0.0
        %vm1082 = vcmp.ge.f32.partialorder %v954, 0.0
        %vm1083 = vcmp.ge.f32.partialorder %v955, 0.0
        %vm1084 = vcmp.ge.f32.partialorder %v956, 0.0
        %vm1085 = vcmp.ge.f32.partialorder %v957, 0.0
        %vm1086 = vcmp.ge.f32.partialorder %v958, 0.0
        %vm1087 = vcmp.ge.f32.partialorder %v959, 0.0
        %vm1088 = vcmp.ge.f32.partialorder %v960, 0.0
        %vm1089 = vcmp.ge.f32.partialorder %v961, 0.0
        %vm1090 = vcmp.ge.f32.partialorder %v962, 0.0
        %vm1091 = vcmp.ge.f32.partialorder %v963, 0.0
        %vm1092 = vcmp.ge.f32.partialorder %v964, 0.0
        %vm1093 = vcmp.ge.f32.partialorder %v965, 0.0
        %vm1094 = vcmp.ge.f32.partialorder %v966, 0.0
        %vm1095 = vcmp.ge.f32.partialorder %v967, 0.0
        %vm1096 = vcmp.ge.f32.partialorder %v968, 0.0
        %vm1097 = vcmp.ge.f32.partialorder %v969, 0.0
        %vm1098 = vcmp.ge.f32.partialorder %v970, 0.0
        %vm1099 = vcmp.ge.f32.partialorder %v971, 0.0
        %vm1100 = vcmp.ge.f32.partialorder %v972, 0.0
        %vm1101 = vcmp.ge.f32.partialorder %v973, 0.0
        %vm1102 = vcmp.ge.f32.partialorder %v974, 0.0
        %vm1103 = vcmp.ge.f32.partialorder %v975, 0.0
        %vm1104 = vcmp.ge.f32.partialorder %v976, 0.0
        %vm1105 = vcmp.ge.f32.partialorder %v977, 0.0
        %vm1106 = vcmp.ge.f32.partialorder %v978, 0.0
        %vm1107 = vcmp.ge.f32.partialorder %v979, 0.0
        %vm1108 = vcmp.ge.f32.partialorder %v980, 0.0
        %vm1109 = vcmp.ge.f32.partialorder %v981, 0.0
        %vm1110 = vcmp.ge.f32.partialorder %v982, 0.0
        %vm1111 = vcmp.ge.f32.partialorder %v983, 0.0
        %vm1112 = vcmp.ge.f32.partialorder %v984, 0.0
        %vm1113 = vcmp.ge.f32.partialorder %v985, 0.0
        %vm1114 = vcmp.ge.f32.partialorder %v986, 0.0
        %vm1115 = vcmp.ge.f32.partialorder %v987, 0.0
        %vm1116 = vcmp.ge.f32.partialorder %v988, 0.0
        %vm1117 = vcmp.ge.f32.partialorder %v989, 0.0
        %vm1118 = vcmp.ge.f32.partialorder %v990, 0.0
        %vm1119 = vcmp.ge.f32.partialorder %v991, 0.0
        %vm1120 = vcmp.ge.f32.partialorder %v992, 0.0
        %vm1121 = vcmp.ge.f32.partialorder %v993, 0.0
        %vm1122 = vcmp.ge.f32.partialorder %v994, 0.0
        %vm1123 = vcmp.ge.f32.partialorder %v995, 0.0
        %vm1124 = vcmp.ge.f32.partialorder %v996, 0.0
        %vm1125 = vcmp.ge.f32.partialorder %v997, 0.0
        %vm1126 = vcmp.ge.f32.partialorder %v998, 0.0
        %vm1127 = vcmp.ge.f32.partialorder %v999, 0.0
        %vm1128 = vcmp.ge.f32.partialorder %v1000, 0.0
        %vm1129 = vcmp.ge.f32.partialorder %v1001, 0.0
        %vm1130 = vcmp.ge.f32.partialorder %v1002, 0.0
        %vm1131 = vcmp.ge.f32.partialorder %v1003, 0.0
        %vm1132 = vcmp.ge.f32.partialorder %v1004, 0.0
        %vm1133 = vcmp.ge.f32.partialorder %v1005, 0.0
        %vm1134 = vcmp.ge.f32.partialorder %v1006, 0.0
        %vm1135 = vcmp.ge.f32.partialorder %v1007, 0.0
        %vm1136 = vcmp.ge.f32.partialorder %v1008, 0.0
        %vm1137 = vcmp.ge.f32.partialorder %v1009, 0.0
        %vm1138 = vcmp.ge.f32.partialorder %v1010, 0.0
        %vm1139 = vcmp.ge.f32.partialorder %v1011, 0.0
        %vm1140 = vcmp.ge.f32.partialorder %v1012, 0.0
        %vm1141 = vcmp.ge.f32.partialorder %v1013, 0.0
        %vm1142 = vcmp.ge.f32.partialorder %v1014, 0.0
        %vm1143 = vcmp.ge.f32.partialorder %v1015, 0.0
        %vm1144 = vcmp.ge.f32.partialorder %v1016, 0.0
        %vm1145 = vcmp.ge.f32.partialorder %v1017, 0.0
        %vm1146 = vcmp.ge.f32.partialorder %v1018, 0.0
        %vm1147 = vcmp.ge.f32.partialorder %v1019, 0.0
        %vm1148 = vcmp.ge.f32.partialorder %v1020, 0.0
        %vm1149 = vcmp.ge.f32.partialorder %v1021, 0.0
        %vm1150 = vcmp.ge.f32.partialorder %v1022, 0.0
        %vm1151 = vcmp.ge.f32.partialorder %v1023, 0.0
        %vm1152 = vcmp.ge.f32.partialorder %v1024, 0.0
        %vm1153 = vcmp.ge.f32.partialorder %v1025, 0.0
        %vm1154 = vcmp.ge.f32.partialorder %v1026, 0.0
        %vm1155 = vcmp.ge.f32.partialorder %v1027, 0.0
        %vm1156 = vcmp.ge.f32.partialorder %v1028, 0.0
        %vm1157 = vcmp.ge.f32.partialorder %v1029, 0.0
        %v1158 = vmul.f32 %v902, 0.2
        %v1159 = vmul.f32 %v903, 0.2
        %v1160 = vmul.f32 %v904, 0.2
        %v1161 = vmul.f32 %v905, 0.2
        %v1162 = vmul.f32 %v906, 0.2
        %v1163 = vmul.f32 %v907, 0.2
        %v1164 = vmul.f32 %v908, 0.2
        %v1165 = vmul.f32 %v909, 0.2
        %v1166 = vmul.f32 %v910, 0.2
        %v1167 = vmul.f32 %v911, 0.2
        %v1168 = vmul.f32 %v912, 0.2
        %v1169 = vmul.f32 %v913, 0.2
        %v1170 = vmul.f32 %v914, 0.2
        %v1171 = vmul.f32 %v915, 0.2
        %v1172 = vmul.f32 %v916, 0.2
        %v1173 = vmul.f32 %v917, 0.2
        %v1174 = vmul.f32 %v918, 0.2
        %v1175 = vmul.f32 %v919, 0.2
        %v1176 = vmul.f32 %v920, 0.2
        %v1177 = vmul.f32 %v921, 0.2
        %v1178 = vmul.f32 %v922, 0.2
        %v1179 = vmul.f32 %v923, 0.2
        %v1180 = vmul.f32 %v924, 0.2
        %v1181 = vmul.f32 %v925, 0.2
        %v1182 = vmul.f32 %v926, 0.2
        %v1183 = vmul.f32 %v927, 0.2
        %v1184 = vmul.f32 %v928, 0.2
        %v1185 = vmul.f32 %v929, 0.2
        %v1186 = vmul.f32 %v930, 0.2
        %v1187 = vmul.f32 %v931, 0.2
        %v1188 = vmul.f32 %v932, 0.2
        %v1189 = vmul.f32 %v933, 0.2
        %v1190 = vmul.f32 %v934, 0.2
        %v1191 = vmul.f32 %v935, 0.2
        %v1192 = vmul.f32 %v936, 0.2
        %v1193 = vmul.f32 %v937, 0.2
        %v1194 = vmul.f32 %v938, 0.2
        %v1195 = vmul.f32 %v939, 0.2
        %v1196 = vmul.f32 %v940, 0.2
        %v1197 = vmul.f32 %v941, 0.2
        %v1198 = vmul.f32 %v942, 0.2
        %v1199 = vmul.f32 %v943, 0.2
        %v1200 = vmul.f32 %v944, 0.2
        %v1201 = vmul.f32 %v945, 0.2
        %v1202 = vmul.f32 %v946, 0.2
        %v1203 = vmul.f32 %v947, 0.2
        %v1204 = vmul.f32 %v948, 0.2
        %v1205 = vmul.f32 %v949, 0.2
        %v1206 = vmul.f32 %v950, 0.2
        %v1207 = vmul.f32 %v951, 0.2
        %v1208 = vmul.f32 %v952, 0.2
        %v1209 = vmul.f32 %v953, 0.2
        %v1210 = vmul.f32 %v954, 0.2
        %v1211 = vmul.f32 %v955, 0.2
        %v1212 = vmul.f32 %v956, 0.2
        %v1213 = vmul.f32 %v957, 0.2
        %v1214 = vmul.f32 %v958, 0.2
        %v1215 = vmul.f32 %v959, 0.2
        %v1216 = vmul.f32 %v960, 0.2
        %v1217 = vmul.f32 %v961, 0.2
        %v1218 = vmul.f32 %v962, 0.2
        %v1219 = vmul.f32 %v963, 0.2
        %v1220 = vmul.f32 %v964, 0.2
        %v1221 = vmul.f32 %v965, 0.2
        %v1222 = vmul.f32 %v966, 0.2
        %v1223 = vmul.f32 %v967, 0.2
        %v1224 = vmul.f32 %v968, 0.2
        %v1225 = vmul.f32 %v969, 0.2
        %v1226 = vmul.f32 %v970, 0.2
        %v1227 = vmul.f32 %v971, 0.2
        %v1228 = vmul.f32 %v972, 0.2
        %v1229 = vmul.f32 %v973, 0.2
        %v1230 = vmul.f32 %v974, 0.2
        %v1231 = vmul.f32 %v975, 0.2
        %v1232 = vmul.f32 %v976, 0.2
        %v1233 = vmul.f32 %v977, 0.2
        %v1234 = vmul.f32 %v978, 0.2
        %v1235 = vmul.f32 %v979, 0.2
        %v1236 = vmul.f32 %v980, 0.2
        %v1237 = vmul.f32 %v981, 0.2
        %v1238 = vmul.f32 %v982, 0.2
        %v1239 = vmul.f32 %v983, 0.2
        %v1240 = vmul.f32 %v984, 0.2
        %v1241 = vmul.f32 %v985, 0.2
        %v1242 = vmul.f32 %v986, 0.2
        %v1243 = vmul.f32 %v987, 0.2
        %v1244 = vmul.f32 %v988, 0.2
        %v1245 = vmul.f32 %v989, 0.2
        %v1246 = vmul.f32 %v990, 0.2
        %v1247 = vmul.f32 %v991, 0.2
        %v1248 = vmul.f32 %v992, 0.2
        %v1249 = vmul.f32 %v993, 0.2
        %v1250 = vmul.f32 %v994, 0.2
        %v1251 = vmul.f32 %v995, 0.2
        %v1252 = vmul.f32 %v996, 0.2
        %v1253 = vmul.f32 %v997, 0.2
        %v1254 = vmul.f32 %v998, 0.2
        %v1255 = vmul.f32 %v999, 0.2
        %v1256 = vmul.f32 %v1000, 0.2
        %v1257 = vmul.f32 %v1001, 0.2
        %v1258 = vmul.f32 %v1002, 0.2
        %v1259 = vmul.f32 %v1003, 0.2
        %v1260 = vmul.f32 %v1004, 0.2
        %v1261 = vmul.f32 %v1005, 0.2
        %v1262 = vmul.f32 %v1006, 0.2
        %v1263 = vmul.f32 %v1007, 0.2
        %v1264 = vmul.f32 %v1008, 0.2
        %v1265 = vmul.f32 %v1009, 0.2
        %v1266 = vmul.f32 %v1010, 0.2
        %v1267 = vmul.f32 %v1011, 0.2
        %v1268 = vmul.f32 %v1012, 0.2
        %v1269 = vmul.f32 %v1013, 0.2
        %v1270 = vmul.f32 %v1014, 0.2
        %v1271 = vmul.f32 %v1015, 0.2
        %v1272 = vmul.f32 %v1016, 0.2
        %v1273 = vmul.f32 %v1017, 0.2
        %v1274 = vmul.f32 %v1018, 0.2
        %v1275 = vmul.f32 %v1019, 0.2
        %v1276 = vmul.f32 %v1020, 0.2
        %v1277 = vmul.f32 %v1021, 0.2
        %v1278 = vmul.f32 %v1022, 0.2
        %v1279 = vmul.f32 %v1023, 0.2
        %v1280 = vmul.f32 %v1024, 0.2
        %v1281 = vmul.f32 %v1025, 0.2
        %v1282 = vmul.f32 %v1026, 0.2
        %v1283 = vmul.f32 %v1027, 0.2
        %v1284 = vmul.f32 %v1028, 0.2
        %v1285 = vmul.f32 %v1029, 0.2
        %v1286 = vsel %vm1030, %v902, %v1158
        %v1287 = vsel %vm1031, %v903, %v1159
        %v1288 = vsel %vm1032, %v904, %v1160
        %v1289 = vsel %vm1033, %v905, %v1161
        %v1290 = vsel %vm1034, %v906, %v1162
        %v1291 = vsel %vm1035, %v907, %v1163
        %v1292 = vsel %vm1036, %v908, %v1164
        %v1293 = vsel %vm1037, %v909, %v1165
        %v1294 = vsel %vm1038, %v910, %v1166
        %v1295 = vsel %vm1039, %v911, %v1167
        %v1296 = vsel %vm1040, %v912, %v1168
        %v1297 = vsel %vm1041, %v913, %v1169
        %v1298 = vsel %vm1042, %v914, %v1170
        %v1299 = vsel %vm1043, %v915, %v1171
        %v1300 = vsel %vm1044, %v916, %v1172
        %v1301 = vsel %vm1045, %v917, %v1173
        %v1302 = vsel %vm1046, %v918, %v1174
        %v1303 = vsel %vm1047, %v919, %v1175
        %v1304 = vsel %vm1048, %v920, %v1176
        %v1305 = vsel %vm1049, %v921, %v1177
        %v1306 = vsel %vm1050, %v922, %v1178
        %v1307 = vsel %vm1051, %v923, %v1179
        %v1308 = vsel %vm1052, %v924, %v1180
        %v1309 = vsel %vm1053, %v925, %v1181
        %v1310 = vsel %vm1054, %v926, %v1182
        %v1311 = vsel %vm1055, %v927, %v1183
        %v1312 = vsel %vm1056, %v928, %v1184
        %v1313 = vsel %vm1057, %v929, %v1185
        %v1314 = vsel %vm1058, %v930, %v1186
        %v1315 = vsel %vm1059, %v931, %v1187
        %v1316 = vsel %vm1060, %v932, %v1188
        %v1317 = vsel %vm1061, %v933, %v1189
        %v1318 = vsel %vm1062, %v934, %v1190
        %v1319 = vsel %vm1063, %v935, %v1191
        %v1320 = vsel %vm1064, %v936, %v1192
        %v1321 = vsel %vm1065, %v937, %v1193
        %v1322 = vsel %vm1066, %v938, %v1194
        %v1323 = vsel %vm1067, %v939, %v1195
        %v1324 = vsel %vm1068, %v940, %v1196
        %v1325 = vsel %vm1069, %v941, %v1197
        %v1326 = vsel %vm1070, %v942, %v1198
        %v1327 = vsel %vm1071, %v943, %v1199
        %v1328 = vsel %vm1072, %v944, %v1200
        %v1329 = vsel %vm1073, %v945, %v1201
        %v1330 = vsel %vm1074, %v946, %v1202
        %v1331 = vsel %vm1075, %v947, %v1203
        %v1332 = vsel %vm1076, %v948, %v1204
        %v1333 = vsel %vm1077, %v949, %v1205
        %v1334 = vsel %vm1078, %v950, %v1206
        %v1335 = vsel %vm1079, %v951, %v1207
        %v1336 = vsel %vm1080, %v952, %v1208
        %v1337 = vsel %vm1081, %v953, %v1209
        %v1338 = vsel %vm1082, %v954, %v1210
        %v1339 = vsel %vm1083, %v955, %v1211
        %v1340 = vsel %vm1084, %v956, %v1212
        %v1341 = vsel %vm1085, %v957, %v1213
        %v1342 = vsel %vm1086, %v958, %v1214
        %v1343 = vsel %vm1087, %v959, %v1215
        %v1344 = vsel %vm1088, %v960, %v1216
        %v1345 = vsel %vm1089, %v961, %v1217
        %v1346 = vsel %vm1090, %v962, %v1218
        %v1347 = vsel %vm1091, %v963, %v1219
        %v1348 = vsel %vm1092, %v964, %v1220
        %v1349 = vsel %vm1093, %v965, %v1221
        %v1350 = vsel %vm1094, %v966, %v1222
        %v1351 = vsel %vm1095, %v967, %v1223
        %v1352 = vsel %vm1096, %v968, %v1224
        %v1353 = vsel %vm1097, %v969, %v1225
        %v1354 = vsel %vm1098, %v970, %v1226
        %v1355 = vsel %vm1099, %v971, %v1227
        %v1356 = vsel %vm1100, %v972, %v1228
        %v1357 = vsel %vm1101, %v973, %v1229
        %v1358 = vsel %vm1102, %v974, %v1230
        %v1359 = vsel %vm1103, %v975, %v1231
        %v1360 = vsel %vm1104, %v976, %v1232
        %v1361 = vsel %vm1105, %v977, %v1233
        %v1362 = vsel %vm1106, %v978, %v1234
        %v1363 = vsel %vm1107, %v979, %v1235
        %v1364 = vsel %vm1108, %v980, %v1236
        %v1365 = vsel %vm1109, %v981, %v1237
        %v1366 = vsel %vm1110, %v982, %v1238
        %v1367 = vsel %vm1111, %v983, %v1239
        %v1368 = vsel %vm1112, %v984, %v1240
        %v1369 = vsel %vm1113, %v985, %v1241
        %v1370 = vsel %vm1114, %v986, %v1242
        %v1371 = vsel %vm1115, %v987, %v1243
        %v1372 = vsel %vm1116, %v988, %v1244
        %v1373 = vsel %vm1117, %v989, %v1245
        %v1374 = vsel %vm1118, %v990, %v1246
        %v1375 = vsel %vm1119, %v991, %v1247
        %v1376 = vsel %vm1120, %v992, %v1248
        %v1377 = vsel %vm1121, %v993, %v1249
        %v1378 = vsel %vm1122, %v994, %v1250
        %v1379 = vsel %vm1123, %v995, %v1251
        %v1380 = vsel %vm1124, %v996, %v1252
        %v1381 = vsel %vm1125, %v997, %v1253
        %v1382 = vsel %vm1126, %v998, %v1254
        %v1383 = vsel %vm1127, %v999, %v1255
        %v1384 = vsel %vm1128, %v1000, %v1256
        %v1385 = vsel %vm1129, %v1001, %v1257
        %v1386 = vsel %vm1130, %v1002, %v1258
        %v1387 = vsel %vm1131, %v1003, %v1259
        %v1388 = vsel %vm1132, %v1004, %v1260
        %v1389 = vsel %vm1133, %v1005, %v1261
        %v1390 = vsel %vm1134, %v1006, %v1262
        %v1391 = vsel %vm1135, %v1007, %v1263
        %v1392 = vsel %vm1136, %v1008, %v1264
        %v1393 = vsel %vm1137, %v1009, %v1265
        %v1394 = vsel %vm1138, %v1010, %v1266
        %v1395 = vsel %vm1139, %v1011, %v1267
        %v1396 = vsel %vm1140, %v1012, %v1268
        %v1397 = vsel %vm1141, %v1013, %v1269
        %v1398 = vsel %vm1142, %v1014, %v1270
        %v1399 = vsel %vm1143, %v1015, %v1271
        %v1400 = vsel %vm1144, %v1016, %v1272
        %v1401 = vsel %vm1145, %v1017, %v1273
        %v1402 = vsel %vm1146, %v1018, %v1274
        %v1403 = vsel %vm1147, %v1019, %v1275
        %v1404 = vsel %vm1148, %v1020, %v1276
        %v1405 = vsel %vm1149, %v1021, %v1277
        %v1406 = vsel %vm1150, %v1022, %v1278
        %v1407 = vsel %vm1151, %v1023, %v1279
        %v1408 = vsel %vm1152, %v1024, %v1280
        %v1409 = vsel %vm1153, %v1025, %v1281
        %v1410 = vsel %vm1154, %v1026, %v1282
        %v1411 = vsel %vm1155, %v1027, %v1283
        %v1412 = vsel %vm1156, %v1028, %v1284
        %v1413 = vsel %vm1157, %v1029, %v1285
        %v1414 = vmul.f32 %v1286, 1.4142135
        %v1415 = vmul.f32 %v1287, 1.4142135
        %v1416 = vmul.f32 %v1288, 1.4142135
        %v1417 = vmul.f32 %v1289, 1.4142135
        %v1418 = vmul.f32 %v1290, 1.4142135
        %v1419 = vmul.f32 %v1291, 1.4142135
        %v1420 = vmul.f32 %v1292, 1.4142135
        %v1421 = vmul.f32 %v1293, 1.4142135
        %v1422 = vmul.f32 %v1294, 1.4142135
        %v1423 = vmul.f32 %v1295, 1.4142135
        %v1424 = vmul.f32 %v1296, 1.4142135
        %v1425 = vmul.f32 %v1297, 1.4142135
        %v1426 = vmul.f32 %v1298, 1.4142135
        %v1427 = vmul.f32 %v1299, 1.4142135
        %v1428 = vmul.f32 %v1300, 1.4142135
        %v1429 = vmul.f32 %v1301, 1.4142135
        %v1430 = vmul.f32 %v1302, 1.4142135
        %v1431 = vmul.f32 %v1303, 1.4142135
        %v1432 = vmul.f32 %v1304, 1.4142135
        %v1433 = vmul.f32 %v1305, 1.4142135
        %v1434 = vmul.f32 %v1306, 1.4142135
        %v1435 = vmul.f32 %v1307, 1.4142135
        %v1436 = vmul.f32 %v1308, 1.4142135
        %v1437 = vmul.f32 %v1309, 1.4142135
        %v1438 = vmul.f32 %v1310, 1.4142135
        %v1439 = vmul.f32 %v1311, 1.4142135
        %v1440 = vmul.f32 %v1312, 1.4142135
        %v1441 = vmul.f32 %v1313, 1.4142135
        %v1442 = vmul.f32 %v1314, 1.4142135
        %v1443 = vmul.f32 %v1315, 1.4142135
        %v1444 = vmul.f32 %v1316, 1.4142135
        %v1445 = vmul.f32 %v1317, 1.4142135
        %v1446 = vmul.f32 %v1318, 1.4142135
        %v1447 = vmul.f32 %v1319, 1.4142135
        %v1448 = vmul.f32 %v1320, 1.4142135
        %v1449 = vmul.f32 %v1321, 1.4142135
        %v1450 = vmul.f32 %v1322, 1.4142135
        %v1451 = vmul.f32 %v1323, 1.4142135
        %v1452 = vmul.f32 %v1324, 1.4142135
        %v1453 = vmul.f32 %v1325, 1.4142135
        %v1454 = vmul.f32 %v1326, 1.4142135
        %v1455 = vmul.f32 %v1327, 1.4142135
        %v1456 = vmul.f32 %v1328, 1.4142135
        %v1457 = vmul.f32 %v1329, 1.4142135
        %v1458 = vmul.f32 %v1330, 1.4142135
        %v1459 = vmul.f32 %v1331, 1.4142135
        %v1460 = vmul.f32 %v1332, 1.4142135
        %v1461 = vmul.f32 %v1333, 1.4142135
        %v1462 = vmul.f32 %v1334, 1.4142135
        %v1463 = vmul.f32 %v1335, 1.4142135
        %v1464 = vmul.f32 %v1336, 1.4142135
        %v1465 = vmul.f32 %v1337, 1.4142135
        %v1466 = vmul.f32 %v1338, 1.4142135
        %v1467 = vmul.f32 %v1339, 1.4142135
        %v1468 = vmul.f32 %v1340, 1.4142135
        %v1469 = vmul.f32 %v1341, 1.4142135
        %v1470 = vmul.f32 %v1342, 1.4142135
        %v1471 = vmul.f32 %v1343, 1.4142135
        %v1472 = vmul.f32 %v1344, 1.4142135
        %v1473 = vmul.f32 %v1345, 1.4142135
        %v1474 = vmul.f32 %v1346, 1.4142135
        %v1475 = vmul.f32 %v1347, 1.4142135
        %v1476 = vmul.f32 %v1348, 1.4142135
        %v1477 = vmul.f32 %v1349, 1.4142135
        %v1478 = vmul.f32 %v1350, 1.4142135
        %v1479 = vmul.f32 %v1351, 1.4142135
        %v1480 = vmul.f32 %v1352, 1.4142135
        %v1481 = vmul.f32 %v1353, 1.4142135
        %v1482 = vmul.f32 %v1354, 1.4142135
        %v1483 = vmul.f32 %v1355, 1.4142135
        %v1484 = vmul.f32 %v1356, 1.4142135
        %v1485 = vmul.f32 %v1357, 1.4142135
        %v1486 = vmul.f32 %v1358, 1.4142135
        %v1487 = vmul.f32 %v1359, 1.4142135
        %v1488 = vmul.f32 %v1360, 1.4142135
        %v1489 = vmul.f32 %v1361, 1.4142135
        %v1490 = vmul.f32 %v1362, 1.4142135
        %v1491 = vmul.f32 %v1363, 1.4142135
        %v1492 = vmul.f32 %v1364, 1.4142135
        %v1493 = vmul.f32 %v1365, 1.4142135
        %v1494 = vmul.f32 %v1366, 1.4142135
        %v1495 = vmul.f32 %v1367, 1.4142135
        %v1496 = vmul.f32 %v1368, 1.4142135
        %v1497 = vmul.f32 %v1369, 1.4142135
        %v1498 = vmul.f32 %v1370, 1.4142135
        %v1499 = vmul.f32 %v1371, 1.4142135
        %v1500 = vmul.f32 %v1372, 1.4142135
        %v1501 = vmul.f32 %v1373, 1.4142135
        %v1502 = vmul.f32 %v1374, 1.4142135
        %v1503 = vmul.f32 %v1375, 1.4142135
        %v1504 = vmul.f32 %v1376, 1.4142135
        %v1505 = vmul.f32 %v1377, 1.4142135
        %v1506 = vmul.f32 %v1378, 1.4142135
        %v1507 = vmul.f32 %v1379, 1.4142135
        %v1508 = vmul.f32 %v1380, 1.4142135
        %v1509 = vmul.f32 %v1381, 1.4142135
        %v1510 = vmul.f32 %v1382, 1.4142135
        %v1511 = vmul.f32 %v1383, 1.4142135
        %v1512 = vmul.f32 %v1384, 1.4142135
        %v1513 = vmul.f32 %v1385, 1.4142135
        %v1514 = vmul.f32 %v1386, 1.4142135
        %v1515 = vmul.f32 %v1387, 1.4142135
        %v1516 = vmul.f32 %v1388, 1.4142135
        %v1517 = vmul.f32 %v1389, 1.4142135
        %v1518 = vmul.f32 %v1390, 1.4142135
        %v1519 = vmul.f32 %v1391, 1.4142135
        %v1520 = vmul.f32 %v1392, 1.4142135
        %v1521 = vmul.f32 %v1393, 1.4142135
        %v1522 = vmul.f32 %v1394, 1.4142135
        %v1523 = vmul.f32 %v1395, 1.4142135
        %v1524 = vmul.f32 %v1396, 1.4142135
        %v1525 = vmul.f32 %v1397, 1.4142135
        %v1526 = vmul.f32 %v1398, 1.4142135
        %v1527 = vmul.f32 %v1399, 1.4142135
        %v1528 = vmul.f32 %v1400, 1.4142135
        %v1529 = vmul.f32 %v1401, 1.4142135
        %v1530 = vmul.f32 %v1402, 1.4142135
        %v1531 = vmul.f32 %v1403, 1.4142135
        %v1532 = vmul.f32 %v1404, 1.4142135
        %v1533 = vmul.f32 %v1405, 1.4142135
        %v1534 = vmul.f32 %v1406, 1.4142135
        %v1535 = vmul.f32 %v1407, 1.4142135
        %v1536 = vmul.f32 %v1408, 1.4142135
        %v1537 = vmul.f32 %v1409, 1.4142135
        %v1538 = vmul.f32 %v1410, 1.4142135
        %v1539 = vmul.f32 %v1411, 1.4142135
        %v1540 = vmul.f32 %v1412, 1.4142135
        %v1541 = vmul.f32 %v1413, 1.4142135
        %v1542 = vpack.c.bf16 %v1418, %v1414
        %v1543 = vpack.c.bf16 %v1419, %v1415
        %v1544 = vpack.c.bf16 %v1420, %v1416
        %v1545 = vpack.c.bf16 %v1421, %v1417
        %v1546 = vpack.c.bf16 %v1426, %v1422
        %v1547 = vpack.c.bf16 %v1427, %v1423
        %v1548 = vpack.c.bf16 %v1428, %v1424
        %v1549 = vpack.c.bf16 %v1429, %v1425
        %v1550 = vpack.c.bf16 %v1434, %v1430
        %v1551 = vpack.c.bf16 %v1435, %v1431
        %v1552 = vpack.c.bf16 %v1436, %v1432
        %v1553 = vpack.c.bf16 %v1437, %v1433
        %v1554 = vpack.c.bf16 %v1442, %v1438
        %v1555 = vpack.c.bf16 %v1443, %v1439
        %v1556 = vpack.c.bf16 %v1444, %v1440
        %v1557 = vpack.c.bf16 %v1445, %v1441
        %v1558 = vpack.c.bf16 %v1450, %v1446
        %v1559 = vpack.c.bf16 %v1451, %v1447
        %v1560 = vpack.c.bf16 %v1452, %v1448
        %v1561 = vpack.c.bf16 %v1453, %v1449
        %v1562 = vpack.c.bf16 %v1458, %v1454
        %v1563 = vpack.c.bf16 %v1459, %v1455
        %v1564 = vpack.c.bf16 %v1460, %v1456
        %v1565 = vpack.c.bf16 %v1461, %v1457
        %v1566 = vpack.c.bf16 %v1466, %v1462
        %v1567 = vpack.c.bf16 %v1467, %v1463
        %v1568 = vpack.c.bf16 %v1468, %v1464
        %v1569 = vpack.c.bf16 %v1469, %v1465
        %v1570 = vpack.c.bf16 %v1474, %v1470
        %v1571 = vpack.c.bf16 %v1475, %v1471
        %v1572 = vpack.c.bf16 %v1476, %v1472
        %v1573 = vpack.c.bf16 %v1477, %v1473
        %v1574 = vpack.c.bf16 %v1482, %v1478
        %v1575 = vpack.c.bf16 %v1483, %v1479
        %v1576 = vpack.c.bf16 %v1484, %v1480
        %v1577 = vpack.c.bf16 %v1485, %v1481
        %v1578 = vpack.c.bf16 %v1490, %v1486
        %v1579 = vpack.c.bf16 %v1491, %v1487
        %v1580 = vpack.c.bf16 %v1492, %v1488
        %v1581 = vpack.c.bf16 %v1493, %v1489
        %v1582 = vpack.c.bf16 %v1498, %v1494
        %v1583 = vpack.c.bf16 %v1499, %v1495
        %v1584 = vpack.c.bf16 %v1500, %v1496
        %v1585 = vpack.c.bf16 %v1501, %v1497
        %v1586 = vpack.c.bf16 %v1506, %v1502
        %v1587 = vpack.c.bf16 %v1507, %v1503
        %v1588 = vpack.c.bf16 %v1508, %v1504
        %v1589 = vpack.c.bf16 %v1509, %v1505
        %v1590 = vpack.c.bf16 %v1514, %v1510
        %v1591 = vpack.c.bf16 %v1515, %v1511
        %v1592 = vpack.c.bf16 %v1516, %v1512
        %v1593 = vpack.c.bf16 %v1517, %v1513
        %v1594 = vpack.c.bf16 %v1522, %v1518
        %v1595 = vpack.c.bf16 %v1523, %v1519
        %v1596 = vpack.c.bf16 %v1524, %v1520
        %v1597 = vpack.c.bf16 %v1525, %v1521
        %v1598 = vpack.c.bf16 %v1530, %v1526
        %v1599 = vpack.c.bf16 %v1531, %v1527
        %v1600 = vpack.c.bf16 %v1532, %v1528
        %v1601 = vpack.c.bf16 %v1533, %v1529
        %v1602 = vpack.c.bf16 %v1538, %v1534
        %v1603 = vpack.c.bf16 %v1539, %v1535
        %v1604 = vpack.c.bf16 %v1540, %v1536
        %v1605 = vpack.c.bf16 %v1541, %v1537
        %v1670 = vunpack.c.l.b16 %v1542
        %v1671 = vunpack.c.l.b16 %v1543
        %v1672 = vunpack.c.l.b16 %v1544
        %v1673 = vunpack.c.l.b16 %v1545
        %v1674 = vunpack.c.h.b16 %v1542
        %v1675 = vunpack.c.h.b16 %v1543
        %v1676 = vunpack.c.h.b16 %v1544
        %v1677 = vunpack.c.h.b16 %v1545
        %v1678 = vunpack.c.l.b16 %v1546
        %v1679 = vunpack.c.l.b16 %v1547
        %v1680 = vunpack.c.l.b16 %v1548
        %v1681 = vunpack.c.l.b16 %v1549
        %v1682 = vunpack.c.h.b16 %v1546
        %v1683 = vunpack.c.h.b16 %v1547
        %v1684 = vunpack.c.h.b16 %v1548
        %v1685 = vunpack.c.h.b16 %v1549
        %v1686 = vunpack.c.l.b16 %v1550
        %v1687 = vunpack.c.l.b16 %v1551
        %v1688 = vunpack.c.l.b16 %v1552
        %v1689 = vunpack.c.l.b16 %v1553
        %v1690 = vunpack.c.h.b16 %v1550
        %v1691 = vunpack.c.h.b16 %v1551
        %v1692 = vunpack.c.h.b16 %v1552
        %v1693 = vunpack.c.h.b16 %v1553
        %v1694 = vunpack.c.l.b16 %v1554
        %v1695 = vunpack.c.l.b16 %v1555
        %v1696 = vunpack.c.l.b16 %v1556
        %v1697 = vunpack.c.l.b16 %v1557
        %v1698 = vunpack.c.h.b16 %v1554
        %v1699 = vunpack.c.h.b16 %v1555
        %v1700 = vunpack.c.h.b16 %v1556
        %v1701 = vunpack.c.h.b16 %v1557
        %v1702 = vunpack.c.l.b16 %v1558
        %v1703 = vunpack.c.l.b16 %v1559
        %v1704 = vunpack.c.l.b16 %v1560
        %v1705 = vunpack.c.l.b16 %v1561
        %v1706 = vunpack.c.h.b16 %v1558
        %v1707 = vunpack.c.h.b16 %v1559
        %v1708 = vunpack.c.h.b16 %v1560
        %v1709 = vunpack.c.h.b16 %v1561
        %v1710 = vunpack.c.l.b16 %v1562
        %v1711 = vunpack.c.l.b16 %v1563
        %v1712 = vunpack.c.l.b16 %v1564
        %v1713 = vunpack.c.l.b16 %v1565
        %v1714 = vunpack.c.h.b16 %v1562
        %v1715 = vunpack.c.h.b16 %v1563
        %v1716 = vunpack.c.h.b16 %v1564
        %v1717 = vunpack.c.h.b16 %v1565
        %v1718 = vunpack.c.l.b16 %v1566
        %v1719 = vunpack.c.l.b16 %v1567
        %v1720 = vunpack.c.l.b16 %v1568
        %v1721 = vunpack.c.l.b16 %v1569
        %v1722 = vunpack.c.h.b16 %v1566
        %v1723 = vunpack.c.h.b16 %v1567
        %v1724 = vunpack.c.h.b16 %v1568
        %v1725 = vunpack.c.h.b16 %v1569
        %v1726 = vunpack.c.l.b16 %v1570
        %v1727 = vunpack.c.l.b16 %v1571
        %v1728 = vunpack.c.l.b16 %v1572
        %v1729 = vunpack.c.l.b16 %v1573
        %v1730 = vunpack.c.h.b16 %v1570
        %v1731 = vunpack.c.h.b16 %v1571
        %v1732 = vunpack.c.h.b16 %v1572
        %v1733 = vunpack.c.h.b16 %v1573
        %v1734 = vunpack.c.l.b16 %v1574
        %v1735 = vunpack.c.l.b16 %v1575
        %v1736 = vunpack.c.l.b16 %v1576
        %v1737 = vunpack.c.l.b16 %v1577
        %v1738 = vunpack.c.h.b16 %v1574
        %v1739 = vunpack.c.h.b16 %v1575
        %v1740 = vunpack.c.h.b16 %v1576
        %v1741 = vunpack.c.h.b16 %v1577
        %v1742 = vunpack.c.l.b16 %v1578
        %v1743 = vunpack.c.l.b16 %v1579
        %v1744 = vunpack.c.l.b16 %v1580
        %v1745 = vunpack.c.l.b16 %v1581
        %v1746 = vunpack.c.h.b16 %v1578
        %v1747 = vunpack.c.h.b16 %v1579
        %v1748 = vunpack.c.h.b16 %v1580
        %v1749 = vunpack.c.h.b16 %v1581
        %v1750 = vunpack.c.l.b16 %v1582
        %v1751 = vunpack.c.l.b16 %v1583
        %v1752 = vunpack.c.l.b16 %v1584
        %v1753 = vunpack.c.l.b16 %v1585
        %v1754 = vunpack.c.h.b16 %v1582
        %v1755 = vunpack.c.h.b16 %v1583
        %v1756 = vunpack.c.h.b16 %v1584
        %v1757 = vunpack.c.h.b16 %v1585
        %v1758 = vunpack.c.l.b16 %v1586
        %v1759 = vunpack.c.l.b16 %v1587
        %v1760 = vunpack.c.l.b16 %v1588
        %v1761 = vunpack.c.l.b16 %v1589
        %v1762 = vunpack.c.h.b16 %v1586
        %v1763 = vunpack.c.h.b16 %v1587
        %v1764 = vunpack.c.h.b16 %v1588
        %v1765 = vunpack.c.h.b16 %v1589
        %v1766 = vunpack.c.l.b16 %v1590
        %v1767 = vunpack.c.l.b16 %v1591
        %v1768 = vunpack.c.l.b16 %v1592
        %v1769 = vunpack.c.l.b16 %v1593
        %v1770 = vunpack.c.h.b16 %v1590
        %v1771 = vunpack.c.h.b16 %v1591
        %v1772 = vunpack.c.h.b16 %v1592
        %v1773 = vunpack.c.h.b16 %v1593
        %v1774 = vunpack.c.l.b16 %v1594
        %v1775 = vunpack.c.l.b16 %v1595
        %v1776 = vunpack.c.l.b16 %v1596
        %v1777 = vunpack.c.l.b16 %v1597
        %v1778 = vunpack.c.h.b16 %v1594
        %v1779 = vunpack.c.h.b16 %v1595
        %v1780 = vunpack.c.h.b16 %v1596
        %v1781 = vunpack.c.h.b16 %v1597
        %v1782 = vunpack.c.l.b16 %v1598
        %v1783 = vunpack.c.l.b16 %v1599
        %v1784 = vunpack.c.l.b16 %v1600
        %v1785 = vunpack.c.l.b16 %v1601
        %v1786 = vunpack.c.h.b16 %v1598
        %v1787 = vunpack.c.h.b16 %v1599
        %v1788 = vunpack.c.h.b16 %v1600
        %v1789 = vunpack.c.h.b16 %v1601
        %v1790 = vunpack.c.l.b16 %v1602
        %v1791 = vunpack.c.l.b16 %v1603
        %v1792 = vunpack.c.l.b16 %v1604
        %v1793 = vunpack.c.l.b16 %v1605
        %v1794 = vunpack.c.h.b16 %v1602
        %v1795 = vunpack.c.h.b16 %v1603
        %v1796 = vunpack.c.h.b16 %v1604
        %v1797 = vunpack.c.h.b16 %v1605
        %v1798 = vpack.c.b16 %v1671, %v1670
        %v1799 = vpack.c.b16 %v1673, %v1672
        %v1800 = vpack.c.b16 %v1675, %v1674
        %v1801 = vpack.c.b16 %v1677, %v1676
        %v1802 = vpack.c.b16 %v1679, %v1678
        %v1803 = vpack.c.b16 %v1681, %v1680
        %v1804 = vpack.c.b16 %v1683, %v1682
        %v1805 = vpack.c.b16 %v1685, %v1684
        %v1806 = vpack.c.b16 %v1687, %v1686
        %v1807 = vpack.c.b16 %v1689, %v1688
        %v1808 = vpack.c.b16 %v1691, %v1690
        %v1809 = vpack.c.b16 %v1693, %v1692
        %v1810 = vpack.c.b16 %v1695, %v1694
        %v1811 = vpack.c.b16 %v1697, %v1696
        %v1812 = vpack.c.b16 %v1699, %v1698
        %v1813 = vpack.c.b16 %v1701, %v1700
        %v1814 = vpack.c.b16 %v1703, %v1702
        %v1815 = vpack.c.b16 %v1705, %v1704
        %v1816 = vpack.c.b16 %v1707, %v1706
        %v1817 = vpack.c.b16 %v1709, %v1708
        %v1818 = vpack.c.b16 %v1711, %v1710
        %v1819 = vpack.c.b16 %v1713, %v1712
        %v1820 = vpack.c.b16 %v1715, %v1714
        %v1821 = vpack.c.b16 %v1717, %v1716
        %v1822 = vpack.c.b16 %v1719, %v1718
        %v1823 = vpack.c.b16 %v1721, %v1720
        %v1824 = vpack.c.b16 %v1723, %v1722
        %v1825 = vpack.c.b16 %v1725, %v1724
        %v1826 = vpack.c.b16 %v1727, %v1726
        %v1827 = vpack.c.b16 %v1729, %v1728
        %v1828 = vpack.c.b16 %v1731, %v1730
        %v1829 = vpack.c.b16 %v1733, %v1732
        %v1830 = vpack.c.b16 %v1735, %v1734
        %v1831 = vpack.c.b16 %v1737, %v1736
        %v1832 = vpack.c.b16 %v1739, %v1738
        %v1833 = vpack.c.b16 %v1741, %v1740
        %v1834 = vpack.c.b16 %v1743, %v1742
        %v1835 = vpack.c.b16 %v1745, %v1744
        %v1836 = vpack.c.b16 %v1747, %v1746
        %v1837 = vpack.c.b16 %v1749, %v1748
        %v1838 = vpack.c.b16 %v1751, %v1750
        %v1839 = vpack.c.b16 %v1753, %v1752
        %v1840 = vpack.c.b16 %v1755, %v1754
        %v1841 = vpack.c.b16 %v1757, %v1756
        %v1842 = vpack.c.b16 %v1759, %v1758
        %v1843 = vpack.c.b16 %v1761, %v1760
        %v1844 = vpack.c.b16 %v1763, %v1762
        %v1845 = vpack.c.b16 %v1765, %v1764
        %v1846 = vpack.c.b16 %v1767, %v1766
        %v1847 = vpack.c.b16 %v1769, %v1768
        %v1848 = vpack.c.b16 %v1771, %v1770
        %v1849 = vpack.c.b16 %v1773, %v1772
        %v1850 = vpack.c.b16 %v1775, %v1774
        %v1851 = vpack.c.b16 %v1777, %v1776
        %v1852 = vpack.c.b16 %v1779, %v1778
        %v1853 = vpack.c.b16 %v1781, %v1780
        %v1854 = vpack.c.b16 %v1783, %v1782
        %v1855 = vpack.c.b16 %v1785, %v1784
        %v1856 = vpack.c.b16 %v1787, %v1786
        %v1857 = vpack.c.b16 %v1789, %v1788
        %v1858 = vpack.c.b16 %v1791, %v1790
        %v1859 = vpack.c.b16 %v1793, %v1792
        %v1860 = vpack.c.b16 %v1795, %v1794
        %v1861 = vpack.c.b16 %v1797, %v1796
        %1926 = vst [vmem:[%s163] sm:$0xff] %v1798
        %1927 = vst [vmem:[%s163 + $0x8] sm:$0xff] %v1799
        %1928 = vst [vmem:[%s163 + $0x10] sm:$0xff] %v1800
        %1929 = vst [vmem:[%s163 + $0x18] sm:$0xff] %v1801
        %1930 = vst [vmem:[%s163 + $0x20] sm:$0xff] %v1802
        %1931 = vst [vmem:[%s163 + $0x28] sm:$0xff] %v1803
        %1932 = vst [vmem:[%s163 + $0x30] sm:$0xff] %v1804
        %1933 = vst [vmem:[%s163 + $0x38] sm:$0xff] %v1805
        %1934 = vst [vmem:[%s163 + $0x40] sm:$0xff] %v1806
        %1935 = vst [vmem:[%s163 + $0x48] sm:$0xff] %v1807
        %1936 = vst [vmem:[%s163 + $0x50] sm:$0xff] %v1808
        %1937 = vst [vmem:[%s163 + $0x58] sm:$0xff] %v1809
        %1938 = vst [vmem:[%s163 + $0x60] sm:$0xff] %v1810
        %1939 = vst [vmem:[%s163 + $0x68] sm:$0xff] %v1811
        %1940 = vst [vmem:[%s163 + $0x70] sm:$0xff] %v1812
        %1941 = vst [vmem:[%s163 + $0x78] sm:$0xff] %v1813
        %1942 = vst [vmem:[%s163 + $0x80] sm:$0xff] %v1814
        %1943 = vst [vmem:[%s163 + $0x88] sm:$0xff] %v1815
        %1944 = vst [vmem:[%s163 + $0x90] sm:$0xff] %v1816
        %1945 = vst [vmem:[%s163 + $0x98] sm:$0xff] %v1817
        %1946 = vst [vmem:[%s163 + $0xa0] sm:$0xff] %v1818
        %1947 = vst [vmem:[%s163 + $0xa8] sm:$0xff] %v1819
        %1948 = vst [vmem:[%s163 + $0xb0] sm:$0xff] %v1820
        %1949 = vst [vmem:[%s163 + $0xb8] sm:$0xff] %v1821
        %1950 = vst [vmem:[%s163 + $0xc0] sm:$0xff] %v1822
        %1951 = vst [vmem:[%s163 + $0xc8] sm:$0xff] %v1823
        %1952 = vst [vmem:[%s163 + $0xd0] sm:$0xff] %v1824
        %1953 = vst [vmem:[%s163 + $0xd8] sm:$0xff] %v1825
        %1954 = vst [vmem:[%s163 + $0xe0] sm:$0xff] %v1826
        %1955 = vst [vmem:[%s163 + $0xe8] sm:$0xff] %v1827
        %1956 = vst [vmem:[%s163 + $0xf0] sm:$0xff] %v1828
        %1957 = vst [vmem:[%s163 + $0xf8] sm:$0xff] %v1829
        %1958 = vst [vmem:[%s163 + $0x100] sm:$0xff] %v1830
        %1959 = vst [vmem:[%s163 + $0x108] sm:$0xff] %v1831
        %1960 = vst [vmem:[%s163 + $0x110] sm:$0xff] %v1832
        %1961 = vst [vmem:[%s163 + $0x118] sm:$0xff] %v1833
        %1962 = vst [vmem:[%s163 + $0x120] sm:$0xff] %v1834
        %1963 = vst [vmem:[%s163 + $0x128] sm:$0xff] %v1835
        %1964 = vst [vmem:[%s163 + $0x130] sm:$0xff] %v1836
        %1965 = vst [vmem:[%s163 + $0x138] sm:$0xff] %v1837
        %1966 = vst [vmem:[%s163 + $0x140] sm:$0xff] %v1838
        %1967 = vst [vmem:[%s163 + $0x148] sm:$0xff] %v1839
        %1968 = vst [vmem:[%s163 + $0x150] sm:$0xff] %v1840
        %1969 = vst [vmem:[%s163 + $0x158] sm:$0xff] %v1841
        %1970 = vst [vmem:[%s163 + $0x160] sm:$0xff] %v1842
        %1971 = vst [vmem:[%s163 + $0x168] sm:$0xff] %v1843
        %1972 = vst [vmem:[%s163 + $0x170] sm:$0xff] %v1844
        %1973 = vst [vmem:[%s163 + $0x178] sm:$0xff] %v1845
        %1974 = vst [vmem:[%s163 + $0x180] sm:$0xff] %v1846
        %1975 = vst [vmem:[%s163 + $0x188] sm:$0xff] %v1847
        %1976 = vst [vmem:[%s163 + $0x190] sm:$0xff] %v1848
        %1977 = vst [vmem:[%s163 + $0x198] sm:$0xff] %v1849
        %1978 = vst [vmem:[%s163 + $0x1a0] sm:$0xff] %v1850
        %1979 = vst [vmem:[%s163 + $0x1a8] sm:$0xff] %v1851
        %1980 = vst [vmem:[%s163 + $0x1b0] sm:$0xff] %v1852
        %1981 = vst [vmem:[%s163 + $0x1b8] sm:$0xff] %v1853
        %1982 = vst [vmem:[%s163 + $0x1c0] sm:$0xff] %v1854
        %1983 = vst [vmem:[%s163 + $0x1c8] sm:$0xff] %v1855
        %1984 = vst [vmem:[%s163 + $0x1d0] sm:$0xff] %v1856
        %1985 = vst [vmem:[%s163 + $0x1d8] sm:$0xff] %v1857
        %1986 = vst [vmem:[%s163 + $0x1e0] sm:$0xff] %v1858
        %1987 = vst [vmem:[%s163 + $0x1e8] sm:$0xff] %v1859
        %1988 = vst [vmem:[%s163 + $0x1f0] sm:$0xff] %v1860
        %1989 = vst [vmem:[%s163 + $0x1f8] sm:$0xff] %v1861
        %s1990 = sand.u32 %s93, 1
        %s1991 = scalar_lea.sflag [#allocation3], %s1990
        %s1992 = sand.u32 %s93, 1
        %s1993 = smul.addr %s1992, 512
        %s1994 = scalar_lea.vmem [#allocation2], %s1993
        // Predicated region
        $region33: #{tpu_custom_call.1} parent=31 // pred_check
          %p1995 = pneg %p103
        $region34: #{tpu_custom_call.1} parent=31 // pred_check_branch
          %1997 = sbr.rel (%p1995) target = $region36
        $region35: #{tpu_custom_call.1} parent=31 // pred_region
          %s1999 = ssub.s32 8192, 8192
          %2000 = vsyncadd %s1991, %s1999
          %s2001 = smul.addr %s17, 128
          %s2002 = smul.addr %s2001, 64
          %s2003 = scalar_lea.hbm %s3, %s2002
          %s2004 = sshll.u32 %s1994, 4
          %s2005 = int_to_ptr.vmem [resolvable:$true] %s2004
          %2010 = dma.vmem_to_hbm [thread:$0]  %s2005, 8192, %s2003, %s1991, 256, 256, 16
        $region36: #{tpu_custom_call.1} parent=31 // pred_fallthru
          _
      $region32: #{tpu_custom_call.1} parent=5 // pred_fallthru
        _
      %p2011 = scmp.le.s32.totalorder 2, %s12
      // Predicated region
      $region37: #{tpu_custom_call.1} parent=5 // pred_check
        %p2012 = pneg %p2011
      $region38: #{tpu_custom_call.1} parent=5 // pred_check_branch
        %2014 = sbr.rel (%p2012) target = $region40
      $region39: #{tpu_custom_call.1} parent=5 // pred_region
        %s2015 = ssub.s32 %s12, 2
        // Predicated region
        $region41: #{tpu_custom_call.1} parent=39 // pred_check
          %p2016 = pneg %p109
        $region42: #{tpu_custom_call.1} parent=39 // pred_check_branch
          %2018 = sbr.rel (%p2016) target = $region44
        $region43: #{tpu_custom_call.1} parent=39 // pred_region
          %s2019 = sand.u32 %s94, 1
          %s2020 = scalar_lea.sflag [#allocation3], %s2019
          %s2021 = sand.u32 %s94, 1
          %s2022 = smul.addr %s2021, 512
          %s2023 = scalar_lea.vmem [#allocation2], %s2022
          %2024 = dma.done %s2020, 8192
        $region44: #{tpu_custom_call.1} parent=39 // pred_fallthru
          _
      $region40: #{tpu_custom_call.1} parent=5 // pred_fallthru
        _
    $region6: #{tpu_custom_call.1} parent=1 // loop_footer
      %s16 = sadd.s32 1, %s12
    $region7: #{tpu_custom_call.1} parent=1 // loop_footer_branch
      %11 = sbr.rel target = $region3
    $region8: #{tpu_custom_call.1} parent=1 // loop_exit
      _
    %2025 = vsyncpa [#allocation3], 1
    %s2026 = scalar_lea.sflag [#allocation3], 1
    %2027 = vsyncpa %s2026, 1

</llo_original>
